<compile_context>
chip_gen: v7x
topology: tpu7x:2x2x1
jax: 0.10.0
libtpu: 0.0.40
codegen_flags: <defaults>
</compile_context>

<pallas_src>
import functools

import jax
import jax.numpy as jnp
import numpy as np
from jax import lax
from jax.experimental import pallas as pl
from jax.experimental.pallas import tpu as pltpu

# ---------------------------------------------------------------------------
# Configuration (small synthetic shapes, matching the module defaults)
# ---------------------------------------------------------------------------
N, INPUT_CH, OUTPUT_CH = 2, 4, 8
H, W = 16, 16
KS = 3
PAD = KS // 2
BLOCK_DEPTH = 2
NUM_SIGMAS = 10
EPS = 1e-5

HW = H * W
MARGIN = PAD * W + PAD                      # max |flat displacement| of a 3x3 tap
ALIGN = max(128, int(np.ceil(MARGIN / 128.0) * 128))       # 128-aligned act offset
PADSEG = int(np.ceil((ALIGN + HW + MARGIN) / 128.0) * 128)  # per-sample segment
# Channel count used inside the kernel: pad input channels up so every layer
# has identical, sublane-aligned shapes (zero-padded weights keep math exact).
CP = int(np.ceil(max(INPUT_CH, OUTPUT_CH) / 8.0) * 8)


# ---------------------------------------------------------------------------
# Host-side constants
# ---------------------------------------------------------------------------
def _make_col_tap_masks(h, w, ks, pad):
    """(n_masked, h*w) f32 validity masks, only for taps with a column shift.

    Row-only shifts (kw == pad) read from the zero margin when out of range,
    so they need no mask.
    """
    ii = np.repeat(np.arange(h), w)
    jj = np.tile(np.arange(w), h)
    masks = []
    for kh in range(ks):
        for kw in range(ks):
            if kw == pad:
                continue
            di, dj = kh - pad, kw - pad
            valid = (ii + di >= 0) & (ii + di < h) & (jj + dj >= 0) & (jj + dj < w)
            masks.append(valid.astype(np.float32))
    return jnp.asarray(np.stack(masks, axis=0))


def _default_samples_per_step(n):
    """v7x (2 TCs/chip): grid=(N,) 'parallel' splits the batch across cores.
    Single-TC chips (v5e/v6e): one lane-batched grid step (less fixed overhead,
    wider MXU column fill)."""
    try:
        kind = jax.devices()[0].device_kind.lower()
    except Exception:
        kind = ""
    if "v7" in kind:
        return 1
    return n


# ---------------------------------------------------------------------------
# Fused Pallas kernel
# ---------------------------------------------------------------------------
def _cin_pp_relu(y, cond, c_out, hw):
    """ConditionalInstanceNorm++ + ReLU in (C, HW) layout (single fused pass).

    y:    (C, HW) conv output for one sample
    cond: (C, 3)  columns = [gamma, alpha, beta] for this sample
    """
    inv_hw = 1.0 / hw
    s1 = jnp.sum(y, axis=1, keepdims=True)                   # (C, 1)
    s2 = jnp.sum(y * y, axis=1, keepdims=True)                # (C, 1)
    mean = s1 * inv_hw
    var = jnp.maximum(s2 * inv_hw - mean * mean, 0.0)         # E[y^2] - mean^2
    hn = (y - mean) * lax.rsqrt(var + EPS)
    # "++" part: normalize per-channel means across channels (unbiased var).
    m = jnp.mean(mean, axis=0, keepdims=True)                 # (1, 1)
    v = jnp.sum((mean - m) ** 2, axis=0, keepdims=True) / (c_out - 1)
    means_n = (mean - m) * lax.rsqrt(v + EPS)                 # (C, 1)
    gamma, alpha, beta = cond[:, 0:1], cond[:, 1:2], cond[:, 2:3]
    return jnp.maximum(gamma * (hn + means_n * alpha) + beta, 0.0)   # ReLU


def _fused_convblock_kernel(*refs, block_depth, samples, h, w, ks, pad,
                            c_out, cp, padseg, align):
    """One grid step = `samples` lane-batched batch elements; all in VMEM.

    refs = [x, masks, (wmat_i, bias_i, cond_i) * block_depth,
            out, pad_scratch, patches_scratch]
    """
    hw = h * w
    x_ref, masks_ref = refs[0], refs[1]
    layer_refs = refs[2:2 + 3 * block_depth]
    o_ref = refs[2 + 3 * block_depth]
    pad_scr, patches_scr = refs[3 + 3 * block_depth:]

    # Zero the padded row buffer once per grid step; the margins stay zero for
    # all layers because only the aligned activation window gets overwritten.
    # (Must be every step: with 'parallel' semantics each core has its own
    # scratch and its own subset of grid indices.)
    pad_scr[...] = jnp.zeros_like(pad_scr)

    masks = masks_ref[...]                    # (6, HW): column-shifted taps only

    # Per-sample activations; layer 0 uses the channel-padded block input.
    acts = [x_ref[:, b * hw:(b + 1) * hw] for b in range(samples)]
    skips = None

    for li in range(block_depth):
        w_ref = layer_refs[3 * li]            # (Cout[*2], ks*ks*CP)
        b_ref = layer_refs[3 * li + 1]        # (Cout[*2], 1)
        c_ref = layer_refs[3 * li + 2]        # (samples*Cout, 3)

        # Write each activation into the 128-aligned center of its segment.
        for b in range(samples):
            base = b * padseg + align
            ab = acts[b]
            if ab.shape[0] == cp:
                pad_scr[:, base:base + hw] = ab
            else:  # keep padded channel rows exactly zero (not hit at this config)
                pad_scr[:ab.shape[0], base:base + hw] = ab
                pad_scr[ab.shape[0]:, base:base + hw] = jnp.zeros(
                    (cp - ab.shape[0], hw), jnp.float32)

        # im2col: write each (optionally masked) shifted window straight into
        # its slot of the patches scratch — no concat, no extra copy.
        t = 0
        mi = 0
        for kh in range(ks):
            for kw in range(ks):
                d = (kh - pad) * w + (kw - pad)
                need_mask = kw != pad          # row-only shifts hit zero margin
                for b in range(samples):
                    start = b * padseg + align + d
                    win = pad_scr[:, start:start + hw]        # (CP, HW)
                    if need_mask:
                        win = win * masks[mi:mi + 1, :]
                    patches_scr[t * cp:(t + 1) * cp, b * hw:(b + 1) * hw] = win
                if need_mask:
                    mi += 1
                t += 1

        # One MXU matmul per layer; layer 0 carries the folded 1x1-skip rows.
        y_full = jnp.dot(w_ref[...], patches_scr[...],
                         preferred_element_type=jnp.float32) + b_ref[...]
        if li == 0:
            y = y_full[:c_out, :]
            skips = [y_full[c_out:, b * hw:(b + 1) * hw] for b in range(samples)]
        else:
            y = y_full

        acts = [
            _cin_pp_relu(y[:, b * hw:(b + 1) * hw],
                         c_ref[b * c_out:(b + 1) * c_out, :], c_out, hw)
            for b in range(samples)
        ]

    # Residual add (skip term from the folded layer-0 matmul) + aligned store.
    for b in range(samples):
        o_ref[:, b * hw:(b + 1) * hw] = (acts[b] + skips[b]).astype(o_ref.dtype)


# ---------------------------------------------------------------------------
# ConvBlock forward (wrapper: only cheap reshapes / weight repacking here)
# ---------------------------------------------------------------------------
def conv_block_forward(x_nchw, sigmas, params, samples_per_step=None):
    n, cin, h, w = x_nchw.shape
    hw = h * w
    assert cin == INPUT_CH
    if samples_per_step is None:
        samples_per_step = _default_samples_per_step(n)
    assert n % samples_per_step == 0
    s = samples_per_step
    steps = n // s
    shw = s * hw

    # NCHW -> lane-batched (steps, CP, S*HW): samples & HW on the lane axis.
    x_flat = x_nchw.reshape(n, cin, hw)
    if CP > cin:
        x_flat = jnp.pad(x_flat, ((0, 0), (0, CP - cin), (0, 0)))
    x_steps = (x_flat.reshape(steps, s, CP, hw)
               .transpose(0, 2, 1, 3).reshape(steps, CP, shw))

    masks = _make_col_tap_masks(h, w, KS, PAD)                 # (6, HW)

    inputs = [x_steps, masks]
    in_specs = [
        pl.BlockSpec((None, CP, shw), lambda b: (b, 0, 0)),
        pl.BlockSpec((masks.shape[0], hw), lambda b: (0, 0)),
    ]

    center = PAD * KS + PAD                                    # center-tap index
    for i in range(BLOCK_DEPTH):
        cin_i = INPUT_CH if i == 0 else OUTPUT_CH
        w_hwio = params["conv_w"][i]                           # (KS,KS,cin_i,Cout)
        if CP > cin_i:
            w_hwio = jnp.pad(w_hwio, ((0, 0), (0, 0), (0, CP - cin_i), (0, 0)))
        wmat = w_hwio.reshape(KS * KS * CP, OUTPUT_CH).T       # (Cout, KS*KS*CP)
        bias = params["conv_b"][i].reshape(OUTPUT_CH, 1)
        if i == 0:
            # Fold the 1x1 skip conv into extra output rows of layer 0's matmul:
            # nonzero only in the center-tap column block (which equals x0).
            skip_w = params["skip_w"]                          # (cin, Cout)
            if CP > cin:
                skip_w = jnp.pad(skip_w, ((0, CP - cin), (0, 0)))
            skip_rows = jnp.zeros((OUTPUT_CH, KS * KS * CP), jnp.float32)
            skip_rows = skip_rows.at[:, center * CP:(center + 1) * CP].set(skip_w.T)
            wmat = jnp.concatenate([wmat, skip_rows], axis=0)  # (2*Cout, KS*KS*CP)
            bias = jnp.concatenate(
                [bias, params["skip_b"].reshape(OUTPUT_CH, 1)], axis=0)
        # ConditionalInstanceNorm++ conditioning: embedding lookup is glue.
        gab = params["embed"][i][sigmas].reshape(n, 3, OUTPUT_CH)
        cond = (jnp.transpose(gab, (0, 2, 1))                  # (N, Cout, 3)
                .reshape(steps, s * OUTPUT_CH, 3))
        inputs += [wmat, bias, cond]
        rows = wmat.shape[0]
        in_specs += [
            pl.BlockSpec((rows, KS * KS * CP), lambda b: (0, 0)),
            pl.BlockSpec((rows, 1), lambda b: (0, 0)),
            pl.BlockSpec((None, s * OUTPUT_CH, 3), lambda b: (b, 0, 0)),
        ]

    kernel = functools.partial(
        _fused_convblock_kernel, block_depth=BLOCK_DEPTH, samples=s,
        h=h, w=w, ks=KS, pad=PAD, c_out=OUTPUT_CH, cp=CP,
        padseg=PADSEG, align=ALIGN)

    out_steps = pl.pallas_call(
        kernel,
        out_shape=jax.ShapeDtypeStruct((steps, OUTPUT_CH, shw), jnp.float32),
        grid=(steps,),
        in_specs=in_specs,
        out_specs=pl.BlockSpec((None, OUTPUT_CH, shw), lambda b: (b, 0, 0)),
        scratch_shapes=[
            pltpu.VMEM((CP, s * PADSEG), jnp.float32),            # padded rows
            pltpu.VMEM((KS * KS * CP, shw), jnp.float32),          # im2col patches
        ],
        compiler_params=pltpu.CompilerParams(dimension_semantics=("parallel",)),
    )(*inputs)

    # check_output: stride=1 + same padding -> spatial dims preserved (static).
    assert out_steps.shape == (steps, OUTPUT_CH, shw), "Output has different shape"
    # maybe_pooling: pooling=False -> identity.
    # TODO(synk): AvgPool2d(k=2, s=2, p=1) branch (pooling=True) not exercised.

    out = (out_steps.reshape(steps, OUTPUT_CH, s, hw)
           .transpose(0, 2, 1, 3).reshape(n, OUTPUT_CH, h, w))     # NCHW
    return out


# ---------------------------------------------------------------------------
# Pure-JAX reference (for self-checking)
# ---------------------------------------------------------------------------
def reference_forward(x_nchw, sigmas, params):
    x = jnp.transpose(x_nchw, (0, 2, 3, 1))
    h = x
    for i in range(BLOCK_DEPTH):
        w, b = params["conv_w"][i], params["conv_b"][i]
        h = lax.conv_general_dilated(
            h, w, (1, 1), [(PAD, PAD), (PAD, PAD)],
            dimension_numbers=("NHWC", "HWIO", "NHWC"),
            precision=lax.Precision.HIGHEST,
        ) + b
        gab = params["embed"][i][sigmas].reshape(x.shape[0], 3, OUTPUT_CH)
        gamma, alpha, beta = gab[:, 0], gab[:, 1], gab[:, 2]
        mean_hw = h.mean(axis=(1, 2), keepdims=True)
        var_hw = ((h - mean_hw) ** 2).mean(axis=(1, 2), keepdims=True)
        hn = (h - mean_hw) / jnp.sqrt(var_hw + EPS)
        means = mean_hw[:, 0, 0, :]
        m = means.mean(-1, keepdims=True)
        v = jnp.var(means, axis=-1, keepdims=True, ddof=1)
        means_n = (means - m) / jnp.sqrt(v + EPS)
        hn = hn + (means_n * alpha)[:, None, None, :]
        h = gamma[:, None, None, :] * hn + beta[:, None, None, :]
        h = jnp.maximum(h, 0.0)
    skip = jnp.einsum("nhwc,cd->nhwd", x, params["skip_w"],
                      precision=lax.Precision.HIGHEST) + params["skip_b"]
    return jnp.transpose(h + skip, (0, 3, 1, 2))


# ---------------------------------------------------------------------------
# Deterministic parameter init
# ---------------------------------------------------------------------------
def init_params(key):
    keys = jax.random.split(key, 2 * BLOCK_DEPTH + BLOCK_DEPTH + 1)
    conv_w, conv_b, embed = [], [], []
    ki = 0
    for i in range(BLOCK_DEPTH):
        cin = INPUT_CH if i == 0 else OUTPUT_CH
        bound = 1.0 / np.sqrt(cin * KS * KS)
        conv_w.append(jax.random.uniform(keys[ki], (KS, KS, cin, OUTPUT_CH),
                                         jnp.float32, -bound, bound))
        conv_b.append(jax.random.uniform(keys[ki + 1], (OUTPUT_CH,),
                                         jnp.float32, -bound, bound))
        ki += 2
    for i in range(BLOCK_DEPTH):
        # NCSN-style init: gamma/alpha ~ N(1, 0.02), beta = 0.
        ga = 1.0 + 0.02 * jax.random.normal(keys[ki], (NUM_SIGMAS, 2 * OUTPUT_CH),
                                            jnp.float32)
        beta = jnp.zeros((NUM_SIGMAS, OUTPUT_CH), jnp.float32)
        embed.append(jnp.concatenate([ga, beta], axis=-1))
        ki += 1
    bound = 1.0 / np.sqrt(INPUT_CH)
    kw, kb = jax.random.split(keys[ki])
    skip_w = jax.random.uniform(kw, (INPUT_CH, OUTPUT_CH), jnp.float32, -bound, bound)
    skip_b = jax.random.uniform(kb, (OUTPUT_CH,), jnp.float32, -bound, bound)
    return {"conv_w": conv_w, "conv_b": conv_b, "embed": embed,
            "skip_w": skip_w, "skip_b": skip_b}


# ---------------------------------------------------------------------------
if __name__ == "__main__":
    root = jax.random.PRNGKey(0)
    kx, kp = jax.random.split(root)

    x = jax.random.normal(kx, (N, INPUT_CH, H, W), jnp.float32)       # NCHW
    sigmas = jnp.array([1, 7], dtype=jnp.int32)                       # per-sample idx
    params = init_params(kp)

    fwd = jax.jit(conv_block_forward)
    out = jax.block_until_ready(fwd(x, sigmas, params))

    ref = jax.block_until_ready(reference_forward(x, sigmas, params))
    assert out.shape == (N, OUTPUT_CH, H, W), out.shape
    np.testing.assert_allclose(np.asarray(out), np.asarray(ref),
                               rtol=1e-2, atol=1e-2)

    print("KERNEL_OK")
</pallas_src>

<mosaic_0001>
module attributes {stable_mosaic.version = 11 : i64} {
  func.func @_fused_convblock_kernel(%arg0: i32, %arg1: memref<1x8x512xf32, #tpu.memory_space<vmem>>, %arg2: memref<6x256xf32, #tpu.memory_space<vmem>>, %arg3: memref<16x72xf32, #tpu.memory_space<vmem>>, %arg4: memref<16x1xf32, #tpu.memory_space<vmem>>, %arg5: memref<1x16x3xf32, #tpu.memory_space<vmem>>, %arg6: memref<8x72xf32, #tpu.memory_space<vmem>>, %arg7: memref<8x1xf32, #tpu.memory_space<vmem>>, %arg8: memref<1x16x3xf32, #tpu.memory_space<vmem>>, %arg9: memref<1x8x512xf32, #tpu.memory_space<vmem>>, %arg10: memref<8x1024xf32, #tpu.memory_space<vmem>>, %arg11: memref<72x512xf32, #tpu.memory_space<vmem>>) attributes {dimension_semantics = [#tpu.dimension_semantics<parallel>], iteration_bounds = array<i64: 1>, scalar_prefetch = 0 : i64, scratch_operands = 2 : i64, tpu.core_type = #tpu.core_type<tc>, window_params = [{transform_indices = @transform_0, window_bounds = array<i64: 1, 8, 512>}, {pipeline_mode = #tpu.pipeline_mode<synchronous>, transform_indices = @transform_1, window_bounds = array<i64: 6, 256>}, {pipeline_mode = #tpu.pipeline_mode<synchronous>, transform_indices = @transform_2, window_bounds = array<i64: 16, 72>}, {pipeline_mode = #tpu.pipeline_mode<synchronous>, transform_indices = @transform_3, window_bounds = array<i64: 16, 1>}, {transform_indices = @transform_4, window_bounds = array<i64: 1, 16, 3>}, {pipeline_mode = #tpu.pipeline_mode<synchronous>, transform_indices = @transform_5, window_bounds = array<i64: 8, 72>}, {pipeline_mode = #tpu.pipeline_mode<synchronous>, transform_indices = @transform_6, window_bounds = array<i64: 8, 1>}, {transform_indices = @transform_7, window_bounds = array<i64: 1, 16, 3>}, {transform_indices = @transform_8, window_bounds = array<i64: 1, 8, 512>}]} {
    %cst = arith.constant 0.000000e+00 : f32
    %0 = vector.broadcast %cst : f32 to vector<8x1024xf32>
    %c0 = arith.constant 0 : index
    %c0_0 = arith.constant 0 : index
    %1 = vector.load %arg10[%c0, %c0_0] : memref<8x1024xf32, #tpu.memory_space<vmem>>, vector<8x1024xf32>
    tpu.vector_store %arg10[%c0, %c0_0], %0 {strides = array<i32>} : memref<8x1024xf32, #tpu.memory_space<vmem>>, vector<8x1024xf32>,
    %c0_1 = arith.constant 0 : index
    %c0_2 = arith.constant 0 : index
    %2 = vector.load %arg2[%c0_1, %c0_2] : memref<6x256xf32, #tpu.memory_space<vmem>>, vector<6x256xf32>
    %c0_3 = arith.constant 0 : index
    %c0_4 = arith.constant 0 : index
    %c0_5 = arith.constant 0 : index
    %3 = vector.load %arg1[%c0_3, %c0_4, %c0_5] : memref<1x8x512xf32, #tpu.memory_space<vmem>>, vector<1x8x256xf32>
    %4 = vector.shape_cast %3 : vector<1x8x256xf32> to vector<8x256xf32>
    %c0_6 = arith.constant 0 : index
    %c0_7 = arith.constant 0 : index
    %c256 = arith.constant 256 : index
    %5 = vector.load %arg1[%c0_6, %c0_7, %c256] : memref<1x8x512xf32, #tpu.memory_space<vmem>>, vector<1x8x256xf32>
    %6 = vector.shape_cast %5 : vector<1x8x256xf32> to vector<8x256xf32>
    %c0_8 = arith.constant 0 : index
    %c128 = arith.constant 128 : index
    %7 = vector.load %arg10[%c0_8, %c128] : memref<8x1024xf32, #tpu.memory_space<vmem>>, vector<8x256xf32>
    tpu.vector_store %arg10[%c0_8, %c128], %4 {strides = array<i32>} : memref<8x1024xf32, #tpu.memory_space<vmem>>, vector<8x256xf32>,
    %c0_9 = arith.constant 0 : index
    %c640 = arith.constant 640 : index
    %8 = vector.load %arg10[%c0_9, %c640] : memref<8x1024xf32, #tpu.memory_space<vmem>>, vector<8x256xf32>
    tpu.vector_store %arg10[%c0_9, %c640], %6 {strides = array<i32>} : memref<8x1024xf32, #tpu.memory_space<vmem>>, vector<8x256xf32>,
    %c0_10 = arith.constant 0 : index
    %c111 = arith.constant 111 : index
    %9 = vector.load %arg10[%c0_10, %c111] : memref<8x1024xf32, #tpu.memory_space<vmem>>, vector<8x256xf32>
    %10 = vector.extract_strided_slice %2 {offsets = [0, 0], sizes = [1, 256], strides = [1, 1]} : vector<6x256xf32> to vector<1x256xf32>
    %11 = vector.broadcast %10 : vector<1x256xf32> to vector<8x256xf32>
    %12 = arith.mulf %9, %11 : vector<8x256xf32>
    %c0_11 = arith.constant 0 : index
    %c0_12 = arith.constant 0 : index
    %13 = vector.load %arg11[%c0_11, %c0_12] : memref<72x512xf32, #tpu.memory_space<vmem>>, vector<8x256xf32>
    tpu.vector_store %arg11[%c0_11, %c0_12], %12 {strides = array<i32>} : memref<72x512xf32, #tpu.memory_space<vmem>>, vector<8x256xf32>,
    %c0_13 = arith.constant 0 : index
    %c623 = arith.constant 623 : index
    %14 = vector.load %arg10[%c0_13, %c623] : memref<8x1024xf32, #tpu.memory_space<vmem>>, vector<8x256xf32>
    %15 = vector.extract_strided_slice %2 {offsets = [0, 0], sizes = [1, 256], strides = [1, 1]} : vector<6x256xf32> to vector<1x256xf32>
    %16 = vector.broadcast %15 : vector<1x256xf32> to vector<8x256xf32>
    %17 = arith.mulf %14, %16 : vector<8x256xf32>
    %c0_14 = arith.constant 0 : index
    %c256_15 = arith.constant 256 : index
    %18 = vector.load %arg11[%c0_14, %c256_15] : memref<72x512xf32, #tpu.memory_space<vmem>>, vector<8x256xf32>
    tpu.vector_store %arg11[%c0_14, %c256_15], %17 {strides = array<i32>} : memref<72x512xf32, #tpu.memory_space<vmem>>, vector<8x256xf32>,
    %c0_16 = arith.constant 0 : index
    %c112 = arith.constant 112 : index
    %19 = vector.load %arg10[%c0_16, %c112] : memref<8x1024xf32, #tpu.memory_space<vmem>>, vector<8x256xf32>
    %c8 = arith.constant 8 : index
    %c0_17 = arith.constant 0 : index
    %20 = vector.load %arg11[%c8, %c0_17] : memref<72x512xf32, #tpu.memory_space<vmem>>, vector<8x256xf32>
    tpu.vector_store %arg11[%c8, %c0_17], %19 {strides = array<i32>} : memref<72x512xf32, #tpu.memory_space<vmem>>, vector<8x256xf32>,
    %c0_18 = arith.constant 0 : index
    %c624 = arith.constant 624 : index
    %21 = vector.load %arg10[%c0_18, %c624] : memref<8x1024xf32, #tpu.memory_space<vmem>>, vector<8x256xf32>
    %c8_19 = arith.constant 8 : index
    %c256_20 = arith.constant 256 : index
    %22 = vector.load %arg11[%c8_19, %c256_20] : memref<72x512xf32, #tpu.memory_space<vmem>>, vector<8x256xf32>
    tpu.vector_store %arg11[%c8_19, %c256_20], %21 {strides = array<i32>} : memref<72x512xf32, #tpu.memory_space<vmem>>, vector<8x256xf32>,
    %c0_21 = arith.constant 0 : index
    %c113 = arith.constant 113 : index
    %23 = vector.load %arg10[%c0_21, %c113] : memref<8x1024xf32, #tpu.memory_space<vmem>>, vector<8x256xf32>
    %24 = vector.extract_strided_slice %2 {offsets = [1, 0], sizes = [1, 256], strides = [1, 1]} : vector<6x256xf32> to vector<1x256xf32>
    %25 = vector.broadcast %24 : vector<1x256xf32> to vector<8x256xf32>
    %26 = arith.mulf %23, %25 : vector<8x256xf32>
    %c16 = arith.constant 16 : index
    %c0_22 = arith.constant 0 : index
    %27 = vector.load %arg11[%c16, %c0_22] : memref<72x512xf32, #tpu.memory_space<vmem>>, vector<8x256xf32>
    tpu.vector_store %arg11[%c16, %c0_22], %26 {strides = array<i32>} : memref<72x512xf32, #tpu.memory_space<vmem>>, vector<8x256xf32>,
    %c0_23 = arith.constant 0 : index
    %c625 = arith.constant 625 : index
    %28 = vector.load %arg10[%c0_23, %c625] : memref<8x1024xf32, #tpu.memory_space<vmem>>, vector<8x256xf32>
    %29 = vector.extract_strided_slice %2 {offsets = [1, 0], sizes = [1, 256], strides = [1, 1]} : vector<6x256xf32> to vector<1x256xf32>
    %30 = vector.broadcast %29 : vector<1x256xf32> to vector<8x256xf32>
    %31 = arith.mulf %28, %30 : vector<8x256xf32>
    %c16_24 = arith.constant 16 : index
    %c256_25 = arith.constant 256 : index
    %32 = vector.load %arg11[%c16_24, %c256_25] : memref<72x512xf32, #tpu.memory_space<vmem>>, vector<8x256xf32>
    tpu.vector_store %arg11[%c16_24, %c256_25], %31 {strides = array<i32>} : memref<72x512xf32, #tpu.memory_space<vmem>>, vector<8x256xf32>,
    %c0_26 = arith.constant 0 : index
    %c127 = arith.constant 127 : index
    %33 = vector.load %arg10[%c0_26, %c127] : memref<8x1024xf32, #tpu.memory_space<vmem>>, vector<8x256xf32>
    %34 = vector.extract_strided_slice %2 {offsets = [2, 0], sizes = [1, 256], strides = [1, 1]} : vector<6x256xf32> to vector<1x256xf32>
    %35 = vector.broadcast %34 : vector<1x256xf32> to vector<8x256xf32>
    %36 = arith.mulf %33, %35 : vector<8x256xf32>
    %c24 = arith.constant 24 : index
    %c0_27 = arith.constant 0 : index
    %37 = vector.load %arg11[%c24, %c0_27] : memref<72x512xf32, #tpu.memory_space<vmem>>, vector<8x256xf32>
    tpu.vector_store %arg11[%c24, %c0_27], %36 {strides = array<i32>} : memref<72x512xf32, #tpu.memory_space<vmem>>, vector<8x256xf32>,
    %c0_28 = arith.constant 0 : index
    %c639 = arith.constant 639 : index
    %38 = vector.load %arg10[%c0_28, %c639] : memref<8x1024xf32, #tpu.memory_space<vmem>>, vector<8x256xf32>
    %39 = vector.extract_strided_slice %2 {offsets = [2, 0], sizes = [1, 256], strides = [1, 1]} : vector<6x256xf32> to vector<1x256xf32>
    %40 = vector.broadcast %39 : vector<1x256xf32> to vector<8x256xf32>
    %41 = arith.mulf %38, %40 : vector<8x256xf32>
    %c24_29 = arith.constant 24 : index
    %c256_30 = arith.constant 256 : index
    %42 = vector.load %arg11[%c24_29, %c256_30] : memref<72x512xf32, #tpu.memory_space<vmem>>, vector<8x256xf32>
    tpu.vector_store %arg11[%c24_29, %c256_30], %41 {strides = array<i32>} : memref<72x512xf32, #tpu.memory_space<vmem>>, vector<8x256xf32>,
    %c0_31 = arith.constant 0 : index
    %c128_32 = arith.constant 128 : index
    %43 = vector.load %arg10[%c0_31, %c128_32] : memref<8x1024xf32, #tpu.memory_space<vmem>>, vector<8x256xf32>
    %c32 = arith.constant 32 : index
    %c0_33 = arith.constant 0 : index
    %44 = vector.load %arg11[%c32, %c0_33] : memref<72x512xf32, #tpu.memory_space<vmem>>, vector<8x256xf32>
    tpu.vector_store %arg11[%c32, %c0_33], %43 {strides = array<i32>} : memref<72x512xf32, #tpu.memory_space<vmem>>, vector<8x256xf32>,
    %c0_34 = arith.constant 0 : index
    %c640_35 = arith.constant 640 : index
    %45 = vector.load %arg10[%c0_34, %c640_35] : memref<8x1024xf32, #tpu.memory_space<vmem>>, vector<8x256xf32>
    %c32_36 = arith.constant 32 : index
    %c256_37 = arith.constant 256 : index
    %46 = vector.load %arg11[%c32_36, %c256_37] : memref<72x512xf32, #tpu.memory_space<vmem>>, vector<8x256xf32>
    tpu.vector_store %arg11[%c32_36, %c256_37], %45 {strides = array<i32>} : memref<72x512xf32, #tpu.memory_space<vmem>>, vector<8x256xf32>,
    %c0_38 = arith.constant 0 : index
    %c129 = arith.constant 129 : index
    %47 = vector.load %arg10[%c0_38, %c129] : memref<8x1024xf32, #tpu.memory_space<vmem>>, vector<8x256xf32>
    %48 = vector.extract_strided_slice %2 {offsets = [3, 0], sizes = [1, 256], strides = [1, 1]} : vector<6x256xf32> to vector<1x256xf32>
    %49 = vector.broadcast %48 : vector<1x256xf32> to vector<8x256xf32>
    %50 = arith.mulf %47, %49 : vector<8x256xf32>
    %c40 = arith.constant 40 : index
    %c0_39 = arith.constant 0 : index
    %51 = vector.load %arg11[%c40, %c0_39] : memref<72x512xf32, #tpu.memory_space<vmem>>, vector<8x256xf32>
    tpu.vector_store %arg11[%c40, %c0_39], %50 {strides = array<i32>} : memref<72x512xf32, #tpu.memory_space<vmem>>, vector<8x256xf32>,
    %c0_40 = arith.constant 0 : index
    %c641 = arith.constant 641 : index
    %52 = vector.load %arg10[%c0_40, %c641] : memref<8x1024xf32, #tpu.memory_space<vmem>>, vector<8x256xf32>
    %53 = vector.extract_strided_slice %2 {offsets = [3, 0], sizes = [1, 256], strides = [1, 1]} : vector<6x256xf32> to vector<1x256xf32>
    %54 = vector.broadcast %53 : vector<1x256xf32> to vector<8x256xf32>
    %55 = arith.mulf %52, %54 : vector<8x256xf32>
    %c40_41 = arith.constant 40 : index
    %c256_42 = arith.constant 256 : index
    %56 = vector.load %arg11[%c40_41, %c256_42] : memref<72x512xf32, #tpu.memory_space<vmem>>, vector<8x256xf32>
    tpu.vector_store %arg11[%c40_41, %c256_42], %55 {strides = array<i32>} : memref<72x512xf32, #tpu.memory_space<vmem>>, vector<8x256xf32>,
    %c0_43 = arith.constant 0 : index
    %c143 = arith.constant 143 : index
    %57 = vector.load %arg10[%c0_43, %c143] : memref<8x1024xf32, #tpu.memory_space<vmem>>, vector<8x256xf32>
    %58 = vector.extract_strided_slice %2 {offsets = [4, 0], sizes = [1, 256], strides = [1, 1]} : vector<6x256xf32> to vector<1x256xf32>
    %59 = vector.broadcast %58 : vector<1x256xf32> to vector<8x256xf32>
    %60 = arith.mulf %57, %59 : vector<8x256xf32>
    %c48 = arith.constant 48 : index
    %c0_44 = arith.constant 0 : index
    %61 = vector.load %arg11[%c48, %c0_44] : memref<72x512xf32, #tpu.memory_space<vmem>>, vector<8x256xf32>
    tpu.vector_store %arg11[%c48, %c0_44], %60 {strides = array<i32>} : memref<72x512xf32, #tpu.memory_space<vmem>>, vector<8x256xf32>,
    %c0_45 = arith.constant 0 : index
    %c655 = arith.constant 655 : index
    %62 = vector.load %arg10[%c0_45, %c655] : memref<8x1024xf32, #tpu.memory_space<vmem>>, vector<8x256xf32>
    %63 = vector.extract_strided_slice %2 {offsets = [4, 0], sizes = [1, 256], strides = [1, 1]} : vector<6x256xf32> to vector<1x256xf32>
    %64 = vector.broadcast %63 : vector<1x256xf32> to vector<8x256xf32>
    %65 = arith.mulf %62, %64 : vector<8x256xf32>
    %c48_46 = arith.constant 48 : index
    %c256_47 = arith.constant 256 : index
    %66 = vector.load %arg11[%c48_46, %c256_47] : memref<72x512xf32, #tpu.memory_space<vmem>>, vector<8x256xf32>
    tpu.vector_store %arg11[%c48_46, %c256_47], %65 {strides = array<i32>} : memref<72x512xf32, #tpu.memory_space<vmem>>, vector<8x256xf32>,
    %c0_48 = arith.constant 0 : index
    %c144 = arith.constant 144 : index
    %67 = vector.load %arg10[%c0_48, %c144] : memref<8x1024xf32, #tpu.memory_space<vmem>>, vector<8x256xf32>
    %c56 = arith.constant 56 : index
    %c0_49 = arith.constant 0 : index
    %68 = vector.load %arg11[%c56, %c0_49] : memref<72x512xf32, #tpu.memory_space<vmem>>, vector<8x256xf32>
    tpu.vector_store %arg11[%c56, %c0_49], %67 {strides = array<i32>} : memref<72x512xf32, #tpu.memory_space<vmem>>, vector<8x256xf32>,
    %c0_50 = arith.constant 0 : index
    %c656 = arith.constant 656 : index
    %69 = vector.load %arg10[%c0_50, %c656] : memref<8x1024xf32, #tpu.memory_space<vmem>>, vector<8x256xf32>
    %c56_51 = arith.constant 56 : index
    %c256_52 = arith.constant 256 : index
    %70 = vector.load %arg11[%c56_51, %c256_52] : memref<72x512xf32, #tpu.memory_space<vmem>>, vector<8x256xf32>
    tpu.vector_store %arg11[%c56_51, %c256_52], %69 {strides = array<i32>} : memref<72x512xf32, #tpu.memory_space<vmem>>, vector<8x256xf32>,
    %c0_53 = arith.constant 0 : index
    %c145 = arith.constant 145 : index
    %71 = vector.load %arg10[%c0_53, %c145] : memref<8x1024xf32, #tpu.memory_space<vmem>>, vector<8x256xf32>
    %72 = vector.extract_strided_slice %2 {offsets = [5, 0], sizes = [1, 256], strides = [1, 1]} : vector<6x256xf32> to vector<1x256xf32>
    %73 = vector.broadcast %72 : vector<1x256xf32> to vector<8x256xf32>
    %74 = arith.mulf %71, %73 : vector<8x256xf32>
    %c64 = arith.constant 64 : index
    %c0_54 = arith.constant 0 : index
    %75 = vector.load %arg11[%c64, %c0_54] : memref<72x512xf32, #tpu.memory_space<vmem>>, vector<8x256xf32>
    tpu.vector_store %arg11[%c64, %c0_54], %74 {strides = array<i32>} : memref<72x512xf32, #tpu.memory_space<vmem>>, vector<8x256xf32>,
    %c0_55 = arith.constant 0 : index
    %c657 = arith.constant 657 : index
    %76 = vector.load %arg10[%c0_55, %c657] : memref<8x1024xf32, #tpu.memory_space<vmem>>, vector<8x256xf32>
    %77 = vector.extract_strided_slice %2 {offsets = [5, 0], sizes = [1, 256], strides = [1, 1]} : vector<6x256xf32> to vector<1x256xf32>
    %78 = vector.broadcast %77 : vector<1x256xf32> to vector<8x256xf32>
    %79 = arith.mulf %76, %78 : vector<8x256xf32>
    %c64_56 = arith.constant 64 : index
    %c256_57 = arith.constant 256 : index
    %80 = vector.load %arg11[%c64_56, %c256_57] : memref<72x512xf32, #tpu.memory_space<vmem>>, vector<8x256xf32>
    tpu.vector_store %arg11[%c64_56, %c256_57], %79 {strides = array<i32>} : memref<72x512xf32, #tpu.memory_space<vmem>>, vector<8x256xf32>,
    %c0_58 = arith.constant 0 : index
    %c0_59 = arith.constant 0 : index
    %81 = vector.load %arg3[%c0_58, %c0_59] : memref<16x72xf32, #tpu.memory_space<vmem>>, vector<16x72xf32>
    %c0_60 = arith.constant 0 : index
    %c0_61 = arith.constant 0 : index
    %82 = vector.load %arg11[%c0_60, %c0_61] : memref<72x512xf32, #tpu.memory_space<vmem>>, vector<72x512xf32>
    %cst_62 = arith.constant dense<0.000000e+00> : vector<16x512xf32>
    %83 = tpu.matmul %81, %82, %cst_62 {dimension_numbers = #tpu.dot_dimension_numbers<[1], [0], [0], [1], [0, 0, 1, 1], [], []>} : vector<16x72xf32>, vector<72x512xf32>, vector<16x512xf32> -> vector<16x512xf32>
    %c0_63 = arith.constant 0 : index
    %c0_64 = arith.constant 0 : index
    %84 = vector.load %arg4[%c0_63, %c0_64] : memref<16x1xf32, #tpu.memory_space<vmem>>, vector<16x1xf32>
    %85 = vector.broadcast %84 : vector<16x1xf32> to vector<16x512xf32>
    %86 = arith.addf %83, %85 : vector<16x512xf32>
    %87 = vector.extract_strided_slice %86 {offsets = [0, 0], sizes = [8, 512], strides = [1, 1]} : vector<16x512xf32> to vector<8x512xf32>
    %88 = vector.extract_strided_slice %86 {offsets = [8, 0], sizes = [8, 256], strides = [1, 1]} : vector<16x512xf32> to vector<8x256xf32>
    %89 = vector.extract_strided_slice %86 {offsets = [8, 256], sizes = [8, 256], strides = [1, 1]} : vector<16x512xf32> to vector<8x256xf32>
    %90 = vector.extract_strided_slice %87 {offsets = [0, 0], sizes = [8, 256], strides = [1, 1]} : vector<8x512xf32> to vector<8x256xf32>
    %c0_65 = arith.constant 0 : index
    %c0_66 = arith.constant 0 : index
    %c0_67 = arith.constant 0 : index
    %91 = vector.load %arg5[%c0_65, %c0_66, %c0_67] : memref<1x16x3xf32, #tpu.memory_space<vmem>>, vector<1x8x3xf32>
    %92 = vector.shape_cast %91 : vector<1x8x3xf32> to vector<8x3xf32>
    %cst_68 = arith.constant dense<0.000000e+00> : vector<8xf32>
    %93 = vector.multi_reduction <add>, %90, %cst_68 [1] : vector<8x256xf32> to vector<8xf32>
    %94 = vector.shape_cast %93 : vector<8xf32> to vector<8x1xf32>
    %95 = arith.mulf %90, %90 : vector<8x256xf32>
    %cst_69 = arith.constant dense<0.000000e+00> : vector<8xf32>
    %96 = vector.multi_reduction <add>, %95, %cst_69 [1] : vector<8x256xf32> to vector<8xf32>
    %97 = vector.shape_cast %96 : vector<8xf32> to vector<8x1xf32>
    %cst_70 = arith.constant 3.906250e-03 : f32
    %98 = vector.broadcast %cst_70 : f32 to vector<8x1xf32>
    %99 = arith.mulf %94, %98 : vector<8x1xf32>
    %cst_71 = arith.constant 3.906250e-03 : f32
    %100 = vector.broadcast %cst_71 : f32 to vector<8x1xf32>
    %101 = arith.mulf %97, %100 : vector<8x1xf32>
    %102 = arith.mulf %99, %99 : vector<8x1xf32>
    %103 = arith.subf %101, %102 : vector<8x1xf32>
    %cst_72 = arith.constant 0.000000e+00 : f32
    %104 = vector.broadcast %cst_72 : f32 to vector<8x1xf32>
    %105 = arith.maximumf %103, %104 : vector<8x1xf32>
    %106 = vector.broadcast %99 : vector<8x1xf32> to vector<8x256xf32>
    %107 = arith.subf %90, %106 : vector<8x256xf32>
    %cst_73 = arith.constant 9.99999974E-6 : f32
    %108 = vector.broadcast %cst_73 : f32 to vector<8x1xf32>
    %109 = arith.addf %105, %108 : vector<8x1xf32>
    %110 = math.rsqrt %109 : vector<8x1xf32>
    %111 = vector.broadcast %110 : vector<8x1xf32> to vector<8x256xf32>
    %112 = arith.mulf %107, %111 : vector<8x256xf32>
    %cst_74 = arith.constant dense<0.000000e+00> : vector<1xf32>
    %113 = vector.multi_reduction <add>, %99, %cst_74 [0] : vector<8x1xf32> to vector<1xf32>
    %114 = vector.shape_cast %113 : vector<1xf32> to vector<1x1xf32>
    %cst_75 = arith.constant 8.000000e+00 : f32
    %115 = vector.broadcast %cst_75 : f32 to vector<1x1xf32>
    %116 = arith.divf %114, %115 : vector<1x1xf32>
    %117 = vector.broadcast %116 : vector<1x1xf32> to vector<8x1xf32>
    %118 = arith.subf %99, %117 : vector<8x1xf32>
    %119 = arith.mulf %118, %118 : vector<8x1xf32>
    %cst_76 = arith.constant dense<0.000000e+00> : vector<1xf32>
    %120 = vector.multi_reduction <add>, %119, %cst_76 [0] : vector<8x1xf32> to vector<1xf32>
    %121 = vector.shape_cast %120 : vector<1xf32> to vector<1x1xf32>
    %cst_77 = arith.constant 7.000000e+00 : f32
    %122 = vector.broadcast %cst_77 : f32 to vector<1x1xf32>
    %123 = arith.divf %121, %122 : vector<1x1xf32>
    %124 = vector.broadcast %116 : vector<1x1xf32> to vector<8x1xf32>
    %125 = arith.subf %99, %124 : vector<8x1xf32>
    %cst_78 = arith.constant 9.99999974E-6 : f32
    %126 = vector.broadcast %cst_78 : f32 to vector<1x1xf32>
    %127 = arith.addf %123, %126 : vector<1x1xf32>
    %128 = math.rsqrt %127 : vector<1x1xf32>
    %129 = vector.broadcast %128 : vector<1x1xf32> to vector<8x1xf32>
    %130 = arith.mulf %125, %129 : vector<8x1xf32>
    %131 = vector.extract_strided_slice %92 {offsets = [0, 0], sizes = [8, 1], strides = [1, 1]} : vector<8x3xf32> to vector<8x1xf32>
    %132 = vector.extract_strided_slice %92 {offsets = [0, 1], sizes = [8, 1], strides = [1, 1]} : vector<8x3xf32> to vector<8x1xf32>
    %133 = vector.extract_strided_slice %92 {offsets = [0, 2], sizes = [8, 1], strides = [1, 1]} : vector<8x3xf32> to vector<8x1xf32>
    %134 = arith.mulf %130, %132 : vector<8x1xf32>
    %135 = vector.broadcast %134 : vector<8x1xf32> to vector<8x256xf32>
    %136 = arith.addf %112, %135 : vector<8x256xf32>
    %137 = vector.broadcast %131 : vector<8x1xf32> to vector<8x256xf32>
    %138 = arith.mulf %137, %136 : vector<8x256xf32>
    %139 = vector.broadcast %133 : vector<8x1xf32> to vector<8x256xf32>
    %140 = arith.addf %138, %139 : vector<8x256xf32>
    %cst_79 = arith.constant 0.000000e+00 : f32
    %141 = vector.broadcast %cst_79 : f32 to vector<8x256xf32>
    %142 = arith.maximumf %140, %141 : vector<8x256xf32>
    %143 = vector.extract_strided_slice %87 {offsets = [0, 256], sizes = [8, 256], strides = [1, 1]} : vector<8x512xf32> to vector<8x256xf32>
    %c0_80 = arith.constant 0 : index
    %c8_81 = arith.constant 8 : index
    %c0_82 = arith.constant 0 : index
    %144 = vector.load %arg5[%c0_80, %c8_81, %c0_82] : memref<1x16x3xf32, #tpu.memory_space<vmem>>, vector<1x8x3xf32>
    %145 = vector.shape_cast %144 : vector<1x8x3xf32> to vector<8x3xf32>
    %cst_83 = arith.constant dense<0.000000e+00> : vector<8xf32>
    %146 = vector.multi_reduction <add>, %143, %cst_83 [1] : vector<8x256xf32> to vector<8xf32>
    %147 = vector.shape_cast %146 : vector<8xf32> to vector<8x1xf32>
    %148 = arith.mulf %143, %143 : vector<8x256xf32>
    %cst_84 = arith.constant dense<0.000000e+00> : vector<8xf32>
    %149 = vector.multi_reduction <add>, %148, %cst_84 [1] : vector<8x256xf32> to vector<8xf32>
    %150 = vector.shape_cast %149 : vector<8xf32> to vector<8x1xf32>
    %cst_85 = arith.constant 3.906250e-03 : f32
    %151 = vector.broadcast %cst_85 : f32 to vector<8x1xf32>
    %152 = arith.mulf %147, %151 : vector<8x1xf32>
    %cst_86 = arith.constant 3.906250e-03 : f32
    %153 = vector.broadcast %cst_86 : f32 to vector<8x1xf32>
    %154 = arith.mulf %150, %153 : vector<8x1xf32>
    %155 = arith.mulf %152, %152 : vector<8x1xf32>
    %156 = arith.subf %154, %155 : vector<8x1xf32>
    %cst_87 = arith.constant 0.000000e+00 : f32
    %157 = vector.broadcast %cst_87 : f32 to vector<8x1xf32>
    %158 = arith.maximumf %156, %157 : vector<8x1xf32>
    %159 = vector.broadcast %152 : vector<8x1xf32> to vector<8x256xf32>
    %160 = arith.subf %143, %159 : vector<8x256xf32>
    %cst_88 = arith.constant 9.99999974E-6 : f32
    %161 = vector.broadcast %cst_88 : f32 to vector<8x1xf32>
    %162 = arith.addf %158, %161 : vector<8x1xf32>
    %163 = math.rsqrt %162 : vector<8x1xf32>
    %164 = vector.broadcast %163 : vector<8x1xf32> to vector<8x256xf32>
    %165 = arith.mulf %160, %164 : vector<8x256xf32>
    %cst_89 = arith.constant dense<0.000000e+00> : vector<1xf32>
    %166 = vector.multi_reduction <add>, %152, %cst_89 [0] : vector<8x1xf32> to vector<1xf32>
    %167 = vector.shape_cast %166 : vector<1xf32> to vector<1x1xf32>
    %cst_90 = arith.constant 8.000000e+00 : f32
    %168 = vector.broadcast %cst_90 : f32 to vector<1x1xf32>
    %169 = arith.divf %167, %168 : vector<1x1xf32>
    %170 = vector.broadcast %169 : vector<1x1xf32> to vector<8x1xf32>
    %171 = arith.subf %152, %170 : vector<8x1xf32>
    %172 = arith.mulf %171, %171 : vector<8x1xf32>
    %cst_91 = arith.constant dense<0.000000e+00> : vector<1xf32>
    %173 = vector.multi_reduction <add>, %172, %cst_91 [0] : vector<8x1xf32> to vector<1xf32>
    %174 = vector.shape_cast %173 : vector<1xf32> to vector<1x1xf32>
    %cst_92 = arith.constant 7.000000e+00 : f32
    %175 = vector.broadcast %cst_92 : f32 to vector<1x1xf32>
    %176 = arith.divf %174, %175 : vector<1x1xf32>
    %177 = vector.broadcast %169 : vector<1x1xf32> to vector<8x1xf32>
    %178 = arith.subf %152, %177 : vector<8x1xf32>
    %cst_93 = arith.constant 9.99999974E-6 : f32
    %179 = vector.broadcast %cst_93 : f32 to vector<1x1xf32>
    %180 = arith.addf %176, %179 : vector<1x1xf32>
    %181 = math.rsqrt %180 : vector<1x1xf32>
    %182 = vector.broadcast %181 : vector<1x1xf32> to vector<8x1xf32>
    %183 = arith.mulf %178, %182 : vector<8x1xf32>
    %184 = vector.extract_strided_slice %145 {offsets = [0, 0], sizes = [8, 1], strides = [1, 1]} : vector<8x3xf32> to vector<8x1xf32>
    %185 = vector.extract_strided_slice %145 {offsets = [0, 1], sizes = [8, 1], strides = [1, 1]} : vector<8x3xf32> to vector<8x1xf32>
    %186 = vector.extract_strided_slice %145 {offsets = [0, 2], sizes = [8, 1], strides = [1, 1]} : vector<8x3xf32> to vector<8x1xf32>
    %187 = arith.mulf %183, %185 : vector<8x1xf32>
    %188 = vector.broadcast %187 : vector<8x1xf32> to vector<8x256xf32>
    %189 = arith.addf %165, %188 : vector<8x256xf32>
    %190 = vector.broadcast %184 : vector<8x1xf32> to vector<8x256xf32>
    %191 = arith.mulf %190, %189 : vector<8x256xf32>
    %192 = vector.broadcast %186 : vector<8x1xf32> to vector<8x256xf32>
    %193 = arith.addf %191, %192 : vector<8x256xf32>
    %cst_94 = arith.constant 0.000000e+00 : f32
    %194 = vector.broadcast %cst_94 : f32 to vector<8x256xf32>
    %195 = arith.maximumf %193, %194 : vector<8x256xf32>
    %c0_95 = arith.constant 0 : index
    %c128_96 = arith.constant 128 : index
    %196 = vector.load %arg10[%c0_95, %c128_96] : memref<8x1024xf32, #tpu.memory_space<vmem>>, vector<8x256xf32>
    tpu.vector_store %arg10[%c0_95, %c128_96], %142 {strides = array<i32>} : memref<8x1024xf32, #tpu.memory_space<vmem>>, vector<8x256xf32>,
    %c0_97 = arith.constant 0 : index
    %c640_98 = arith.constant 640 : index
    %197 = vector.load %arg10[%c0_97, %c640_98] : memref<8x1024xf32, #tpu.memory_space<vmem>>, vector<8x256xf32>
    tpu.vector_store %arg10[%c0_97, %c640_98], %195 {strides = array<i32>} : memref<8x1024xf32, #tpu.memory_space<vmem>>, vector<8x256xf32>,
    %c0_99 = arith.constant 0 : index
    %c111_100 = arith.constant 111 : index
    %198 = vector.load %arg10[%c0_99, %c111_100] : memref<8x1024xf32, #tpu.memory_space<vmem>>, vector<8x256xf32>
    %199 = vector.extract_strided_slice %2 {offsets = [0, 0], sizes = [1, 256], strides = [1, 1]} : vector<6x256xf32> to vector<1x256xf32>
    %200 = vector.broadcast %199 : vector<1x256xf32> to vector<8x256xf32>
    %201 = arith.mulf %198, %200 : vector<8x256xf32>
    %c0_101 = arith.constant 0 : index
    %c0_102 = arith.constant 0 : index
    %202 = vector.load %arg11[%c0_101, %c0_102] : memref<72x512xf32, #tpu.memory_space<vmem>>, vector<8x256xf32>
    tpu.vector_store %arg11[%c0_101, %c0_102], %201 {strides = array<i32>} : memref<72x512xf32, #tpu.memory_space<vmem>>, vector<8x256xf32>,
    %c0_103 = arith.constant 0 : index
    %c623_104 = arith.constant 623 : index
    %203 = vector.load %arg10[%c0_103, %c623_104] : memref<8x1024xf32, #tpu.memory_space<vmem>>, vector<8x256xf32>
    %204 = vector.extract_strided_slice %2 {offsets = [0, 0], sizes = [1, 256], strides = [1, 1]} : vector<6x256xf32> to vector<1x256xf32>
    %205 = vector.broadcast %204 : vector<1x256xf32> to vector<8x256xf32>
    %206 = arith.mulf %203, %205 : vector<8x256xf32>
    %c0_105 = arith.constant 0 : index
    %c256_106 = arith.constant 256 : index
    %207 = vector.load %arg11[%c0_105, %c256_106] : memref<72x512xf32, #tpu.memory_space<vmem>>, vector<8x256xf32>
    tpu.vector_store %arg11[%c0_105, %c256_106], %206 {strides = array<i32>} : memref<72x512xf32, #tpu.memory_space<vmem>>, vector<8x256xf32>,
    %c0_107 = arith.constant 0 : index
    %c112_108 = arith.constant 112 : index
    %208 = vector.load %arg10[%c0_107, %c112_108] : memref<8x1024xf32, #tpu.memory_space<vmem>>, vector<8x256xf32>
    %c8_109 = arith.constant 8 : index
    %c0_110 = arith.constant 0 : index
    %209 = vector.load %arg11[%c8_109, %c0_110] : memref<72x512xf32, #tpu.memory_space<vmem>>, vector<8x256xf32>
    tpu.vector_store %arg11[%c8_109, %c0_110], %208 {strides = array<i32>} : memref<72x512xf32, #tpu.memory_space<vmem>>, vector<8x256xf32>,
    %c0_111 = arith.constant 0 : index
    %c624_112 = arith.constant 624 : index
    %210 = vector.load %arg10[%c0_111, %c624_112] : memref<8x1024xf32, #tpu.memory_space<vmem>>, vector<8x256xf32>
    %c8_113 = arith.constant 8 : index
    %c256_114 = arith.constant 256 : index
    %211 = vector.load %arg11[%c8_113, %c256_114] : memref<72x512xf32, #tpu.memory_space<vmem>>, vector<8x256xf32>
    tpu.vector_store %arg11[%c8_113, %c256_114], %210 {strides = array<i32>} : memref<72x512xf32, #tpu.memory_space<vmem>>, vector<8x256xf32>,
    %c0_115 = arith.constant 0 : index
    %c113_116 = arith.constant 113 : index
    %212 = vector.load %arg10[%c0_115, %c113_116] : memref<8x1024xf32, #tpu.memory_space<vmem>>, vector<8x256xf32>
    %213 = vector.extract_strided_slice %2 {offsets = [1, 0], sizes = [1, 256], strides = [1, 1]} : vector<6x256xf32> to vector<1x256xf32>
    %214 = vector.broadcast %213 : vector<1x256xf32> to vector<8x256xf32>
    %215 = arith.mulf %212, %214 : vector<8x256xf32>
    %c16_117 = arith.constant 16 : index
    %c0_118 = arith.constant 0 : index
    %216 = vector.load %arg11[%c16_117, %c0_118] : memref<72x512xf32, #tpu.memory_space<vmem>>, vector<8x256xf32>
    tpu.vector_store %arg11[%c16_117, %c0_118], %215 {strides = array<i32>} : memref<72x512xf32, #tpu.memory_space<vmem>>, vector<8x256xf32>,
    %c0_119 = arith.constant 0 : index
    %c625_120 = arith.constant 625 : index
    %217 = vector.load %arg10[%c0_119, %c625_120] : memref<8x1024xf32, #tpu.memory_space<vmem>>, vector<8x256xf32>
    %218 = vector.extract_strided_slice %2 {offsets = [1, 0], sizes = [1, 256], strides = [1, 1]} : vector<6x256xf32> to vector<1x256xf32>
    %219 = vector.broadcast %218 : vector<1x256xf32> to vector<8x256xf32>
    %220 = arith.mulf %217, %219 : vector<8x256xf32>
    %c16_121 = arith.constant 16 : index
    %c256_122 = arith.constant 256 : index
    %221 = vector.load %arg11[%c16_121, %c256_122] : memref<72x512xf32, #tpu.memory_space<vmem>>, vector<8x256xf32>
    tpu.vector_store %arg11[%c16_121, %c256_122], %220 {strides = array<i32>} : memref<72x512xf32, #tpu.memory_space<vmem>>, vector<8x256xf32>,
    %c0_123 = arith.constant 0 : index
    %c127_124 = arith.constant 127 : index
    %222 = vector.load %arg10[%c0_123, %c127_124] : memref<8x1024xf32, #tpu.memory_space<vmem>>, vector<8x256xf32>
    %223 = vector.extract_strided_slice %2 {offsets = [2, 0], sizes = [1, 256], strides = [1, 1]} : vector<6x256xf32> to vector<1x256xf32>
    %224 = vector.broadcast %223 : vector<1x256xf32> to vector<8x256xf32>
    %225 = arith.mulf %222, %224 : vector<8x256xf32>
    %c24_125 = arith.constant 24 : index
    %c0_126 = arith.constant 0 : index
    %226 = vector.load %arg11[%c24_125, %c0_126] : memref<72x512xf32, #tpu.memory_space<vmem>>, vector<8x256xf32>
    tpu.vector_store %arg11[%c24_125, %c0_126], %225 {strides = array<i32>} : memref<72x512xf32, #tpu.memory_space<vmem>>, vector<8x256xf32>,
    %c0_127 = arith.constant 0 : index
    %c639_128 = arith.constant 639 : index
    %227 = vector.load %arg10[%c0_127, %c639_128] : memref<8x1024xf32, #tpu.memory_space<vmem>>, vector<8x256xf32>
    %228 = vector.extract_strided_slice %2 {offsets = [2, 0], sizes = [1, 256], strides = [1, 1]} : vector<6x256xf32> to vector<1x256xf32>
    %229 = vector.broadcast %228 : vector<1x256xf32> to vector<8x256xf32>
    %230 = arith.mulf %227, %229 : vector<8x256xf32>
    %c24_129 = arith.constant 24 : index
    %c256_130 = arith.constant 256 : index
    %231 = vector.load %arg11[%c24_129, %c256_130] : memref<72x512xf32, #tpu.memory_space<vmem>>, vector<8x256xf32>
    tpu.vector_store %arg11[%c24_129, %c256_130], %230 {strides = array<i32>} : memref<72x512xf32, #tpu.memory_space<vmem>>, vector<8x256xf32>,
    %c0_131 = arith.constant 0 : index
    %c128_132 = arith.constant 128 : index
    %232 = vector.load %arg10[%c0_131, %c128_132] : memref<8x1024xf32, #tpu.memory_space<vmem>>, vector<8x256xf32>
    %c32_133 = arith.constant 32 : index
    %c0_134 = arith.constant 0 : index
    %233 = vector.load %arg11[%c32_133, %c0_134] : memref<72x512xf32, #tpu.memory_space<vmem>>, vector<8x256xf32>
    tpu.vector_store %arg11[%c32_133, %c0_134], %232 {strides = array<i32>} : memref<72x512xf32, #tpu.memory_space<vmem>>, vector<8x256xf32>,
    %c0_135 = arith.constant 0 : index
    %c640_136 = arith.constant 640 : index
    %234 = vector.load %arg10[%c0_135, %c640_136] : memref<8x1024xf32, #tpu.memory_space<vmem>>, vector<8x256xf32>
    %c32_137 = arith.constant 32 : index
    %c256_138 = arith.constant 256 : index
    %235 = vector.load %arg11[%c32_137, %c256_138] : memref<72x512xf32, #tpu.memory_space<vmem>>, vector<8x256xf32>
    tpu.vector_store %arg11[%c32_137, %c256_138], %234 {strides = array<i32>} : memref<72x512xf32, #tpu.memory_space<vmem>>, vector<8x256xf32>,
    %c0_139 = arith.constant 0 : index
    %c129_140 = arith.constant 129 : index
    %236 = vector.load %arg10[%c0_139, %c129_140] : memref<8x1024xf32, #tpu.memory_space<vmem>>, vector<8x256xf32>
    %237 = vector.extract_strided_slice %2 {offsets = [3, 0], sizes = [1, 256], strides = [1, 1]} : vector<6x256xf32> to vector<1x256xf32>
    %238 = vector.broadcast %237 : vector<1x256xf32> to vector<8x256xf32>
    %239 = arith.mulf %236, %238 : vector<8x256xf32>
    %c40_141 = arith.constant 40 : index
    %c0_142 = arith.constant 0 : index
    %240 = vector.load %arg11[%c40_141, %c0_142] : memref<72x512xf32, #tpu.memory_space<vmem>>, vector<8x256xf32>
    tpu.vector_store %arg11[%c40_141, %c0_142], %239 {strides = array<i32>} : memref<72x512xf32, #tpu.memory_space<vmem>>, vector<8x256xf32>,
    %c0_143 = arith.constant 0 : index
    %c641_144 = arith.constant 641 : index
    %241 = vector.load %arg10[%c0_143, %c641_144] : memref<8x1024xf32, #tpu.memory_space<vmem>>, vector<8x256xf32>
    %242 = vector.extract_strided_slice %2 {offsets = [3, 0], sizes = [1, 256], strides = [1, 1]} : vector<6x256xf32> to vector<1x256xf32>
    %243 = vector.broadcast %242 : vector<1x256xf32> to vector<8x256xf32>
    %244 = arith.mulf %241, %243 : vector<8x256xf32>
    %c40_145 = arith.constant 40 : index
    %c256_146 = arith.constant 256 : index
    %245 = vector.load %arg11[%c40_145, %c256_146] : memref<72x512xf32, #tpu.memory_space<vmem>>, vector<8x256xf32>
    tpu.vector_store %arg11[%c40_145, %c256_146], %244 {strides = array<i32>} : memref<72x512xf32, #tpu.memory_space<vmem>>, vector<8x256xf32>,
    %c0_147 = arith.constant 0 : index
    %c143_148 = arith.constant 143 : index
    %246 = vector.load %arg10[%c0_147, %c143_148] : memref<8x1024xf32, #tpu.memory_space<vmem>>, vector<8x256xf32>
    %247 = vector.extract_strided_slice %2 {offsets = [4, 0], sizes = [1, 256], strides = [1, 1]} : vector<6x256xf32> to vector<1x256xf32>
    %248 = vector.broadcast %247 : vector<1x256xf32> to vector<8x256xf32>
    %249 = arith.mulf %246, %248 : vector<8x256xf32>
    %c48_149 = arith.constant 48 : index
    %c0_150 = arith.constant 0 : index
    %250 = vector.load %arg11[%c48_149, %c0_150] : memref<72x512xf32, #tpu.memory_space<vmem>>, vector<8x256xf32>
    tpu.vector_store %arg11[%c48_149, %c0_150], %249 {strides = array<i32>} : memref<72x512xf32, #tpu.memory_space<vmem>>, vector<8x256xf32>,
    %c0_151 = arith.constant 0 : index
    %c655_152 = arith.constant 655 : index
    %251 = vector.load %arg10[%c0_151, %c655_152] : memref<8x1024xf32, #tpu.memory_space<vmem>>, vector<8x256xf32>
    %252 = vector.extract_strided_slice %2 {offsets = [4, 0], sizes = [1, 256], strides = [1, 1]} : vector<6x256xf32> to vector<1x256xf32>
    %253 = vector.broadcast %252 : vector<1x256xf32> to vector<8x256xf32>
    %254 = arith.mulf %251, %253 : vector<8x256xf32>
    %c48_153 = arith.constant 48 : index
    %c256_154 = arith.constant 256 : index
    %255 = vector.load %arg11[%c48_153, %c256_154] : memref<72x512xf32, #tpu.memory_space<vmem>>, vector<8x256xf32>
    tpu.vector_store %arg11[%c48_153, %c256_154], %254 {strides = array<i32>} : memref<72x512xf32, #tpu.memory_space<vmem>>, vector<8x256xf32>,
    %c0_155 = arith.constant 0 : index
    %c144_156 = arith.constant 144 : index
    %256 = vector.load %arg10[%c0_155, %c144_156] : memref<8x1024xf32, #tpu.memory_space<vmem>>, vector<8x256xf32>
    %c56_157 = arith.constant 56 : index
    %c0_158 = arith.constant 0 : index
    %257 = vector.load %arg11[%c56_157, %c0_158] : memref<72x512xf32, #tpu.memory_space<vmem>>, vector<8x256xf32>
    tpu.vector_store %arg11[%c56_157, %c0_158], %256 {strides = array<i32>} : memref<72x512xf32, #tpu.memory_space<vmem>>, vector<8x256xf32>,
    %c0_159 = arith.constant 0 : index
    %c656_160 = arith.constant 656 : index
    %258 = vector.load %arg10[%c0_159, %c656_160] : memref<8x1024xf32, #tpu.memory_space<vmem>>, vector<8x256xf32>
    %c56_161 = arith.constant 56 : index
    %c256_162 = arith.constant 256 : index
    %259 = vector.load %arg11[%c56_161, %c256_162] : memref<72x512xf32, #tpu.memory_space<vmem>>, vector<8x256xf32>
    tpu.vector_store %arg11[%c56_161, %c256_162], %258 {strides = array<i32>} : memref<72x512xf32, #tpu.memory_space<vmem>>, vector<8x256xf32>,
    %c0_163 = arith.constant 0 : index
    %c145_164 = arith.constant 145 : index
    %260 = vector.load %arg10[%c0_163, %c145_164] : memref<8x1024xf32, #tpu.memory_space<vmem>>, vector<8x256xf32>
    %261 = vector.extract_strided_slice %2 {offsets = [5, 0], sizes = [1, 256], strides = [1, 1]} : vector<6x256xf32> to vector<1x256xf32>
    %262 = vector.broadcast %261 : vector<1x256xf32> to vector<8x256xf32>
    %263 = arith.mulf %260, %262 : vector<8x256xf32>
    %c64_165 = arith.constant 64 : index
    %c0_166 = arith.constant 0 : index
    %264 = vector.load %arg11[%c64_165, %c0_166] : memref<72x512xf32, #tpu.memory_space<vmem>>, vector<8x256xf32>
    tpu.vector_store %arg11[%c64_165, %c0_166], %263 {strides = array<i32>} : memref<72x512xf32, #tpu.memory_space<vmem>>, vector<8x256xf32>,
    %c0_167 = arith.constant 0 : index
    %c657_168 = arith.constant 657 : index
    %265 = vector.load %arg10[%c0_167, %c657_168] : memref<8x1024xf32, #tpu.memory_space<vmem>>, vector<8x256xf32>
    %266 = vector.extract_strided_slice %2 {offsets = [5, 0], sizes = [1, 256], strides = [1, 1]} : vector<6x256xf32> to vector<1x256xf32>
    %267 = vector.broadcast %266 : vector<1x256xf32> to vector<8x256xf32>
    %268 = arith.mulf %265, %267 : vector<8x256xf32>
    %c64_169 = arith.constant 64 : index
    %c256_170 = arith.constant 256 : index
    %269 = vector.load %arg11[%c64_169, %c256_170] : memref<72x512xf32, #tpu.memory_space<vmem>>, vector<8x256xf32>
    tpu.vector_store %arg11[%c64_169, %c256_170], %268 {strides = array<i32>} : memref<72x512xf32, #tpu.memory_space<vmem>>, vector<8x256xf32>,
    %c0_171 = arith.constant 0 : index
    %c0_172 = arith.constant 0 : index
    %270 = vector.load %arg6[%c0_171, %c0_172] : memref<8x72xf32, #tpu.memory_space<vmem>>, vector<8x72xf32>
    %c0_173 = arith.constant 0 : index
    %c0_174 = arith.constant 0 : index
    %271 = vector.load %arg11[%c0_173, %c0_174] : memref<72x512xf32, #tpu.memory_space<vmem>>, vector<72x512xf32>
    %cst_175 = arith.constant dense<0.000000e+00> : vector<8x512xf32>
    %272 = tpu.matmul %270, %271, %cst_175 {dimension_numbers = #tpu.dot_dimension_numbers<[1], [0], [0], [1], [0, 0, 1, 1], [], []>} : vector<8x72xf32>, vector<72x512xf32>, vector<8x512xf32> -> vector<8x512xf32>
    %c0_176 = arith.constant 0 : index
    %c0_177 = arith.constant 0 : index
    %273 = vector.load %arg7[%c0_176, %c0_177] : memref<8x1xf32, #tpu.memory_space<vmem>>, vector<8x1xf32>
    %274 = vector.broadcast %273 : vector<8x1xf32> to vector<8x512xf32>
    %275 = arith.addf %272, %274 : vector<8x512xf32>
    %276 = vector.extract_strided_slice %275 {offsets = [0, 0], sizes = [8, 256], strides = [1, 1]} : vector<8x512xf32> to vector<8x256xf32>
    %c0_178 = arith.constant 0 : index
    %c0_179 = arith.constant 0 : index
    %c0_180 = arith.constant 0 : index
    %277 = vector.load %arg8[%c0_178, %c0_179, %c0_180] : memref<1x16x3xf32, #tpu.memory_space<vmem>>, vector<1x8x3xf32>
    %278 = vector.shape_cast %277 : vector<1x8x3xf32> to vector<8x3xf32>
    %cst_181 = arith.constant dense<0.000000e+00> : vector<8xf32>
    %279 = vector.multi_reduction <add>, %276, %cst_181 [1] : vector<8x256xf32> to vector<8xf32>
    %280 = vector.shape_cast %279 : vector<8xf32> to vector<8x1xf32>
    %281 = arith.mulf %276, %276 : vector<8x256xf32>
    %cst_182 = arith.constant dense<0.000000e+00> : vector<8xf32>
    %282 = vector.multi_reduction <add>, %281, %cst_182 [1] : vector<8x256xf32> to vector<8xf32>
    %283 = vector.shape_cast %282 : vector<8xf32> to vector<8x1xf32>
    %cst_183 = arith.constant 3.906250e-03 : f32
    %284 = vector.broadcast %cst_183 : f32 to vector<8x1xf32>
    %285 = arith.mulf %280, %284 : vector<8x1xf32>
    %cst_184 = arith.constant 3.906250e-03 : f32
    %286 = vector.broadcast %cst_184 : f32 to vector<8x1xf32>
    %287 = arith.mulf %283, %286 : vector<8x1xf32>
    %288 = arith.mulf %285, %285 : vector<8x1xf32>
    %289 = arith.subf %287, %288 : vector<8x1xf32>
    %cst_185 = arith.constant 0.000000e+00 : f32
    %290 = vector.broadcast %cst_185 : f32 to vector<8x1xf32>
    %291 = arith.maximumf %289, %290 : vector<8x1xf32>
    %292 = vector.broadcast %285 : vector<8x1xf32> to vector<8x256xf32>
    %293 = arith.subf %276, %292 : vector<8x256xf32>
    %cst_186 = arith.constant 9.99999974E-6 : f32
    %294 = vector.broadcast %cst_186 : f32 to vector<8x1xf32>
    %295 = arith.addf %291, %294 : vector<8x1xf32>
    %296 = math.rsqrt %295 : vector<8x1xf32>
    %297 = vector.broadcast %296 : vector<8x1xf32> to vector<8x256xf32>
    %298 = arith.mulf %293, %297 : vector<8x256xf32>
    %cst_187 = arith.constant dense<0.000000e+00> : vector<1xf32>
    %299 = vector.multi_reduction <add>, %285, %cst_187 [0] : vector<8x1xf32> to vector<1xf32>
    %300 = vector.shape_cast %299 : vector<1xf32> to vector<1x1xf32>
    %cst_188 = arith.constant 8.000000e+00 : f32
    %301 = vector.broadcast %cst_188 : f32 to vector<1x1xf32>
    %302 = arith.divf %300, %301 : vector<1x1xf32>
    %303 = vector.broadcast %302 : vector<1x1xf32> to vector<8x1xf32>
    %304 = arith.subf %285, %303 : vector<8x1xf32>
    %305 = arith.mulf %304, %304 : vector<8x1xf32>
    %cst_189 = arith.constant dense<0.000000e+00> : vector<1xf32>
    %306 = vector.multi_reduction <add>, %305, %cst_189 [0] : vector<8x1xf32> to vector<1xf32>
    %307 = vector.shape_cast %306 : vector<1xf32> to vector<1x1xf32>
    %cst_190 = arith.constant 7.000000e+00 : f32
    %308 = vector.broadcast %cst_190 : f32 to vector<1x1xf32>
    %309 = arith.divf %307, %308 : vector<1x1xf32>
    %310 = vector.broadcast %302 : vector<1x1xf32> to vector<8x1xf32>
    %311 = arith.subf %285, %310 : vector<8x1xf32>
    %cst_191 = arith.constant 9.99999974E-6 : f32
    %312 = vector.broadcast %cst_191 : f32 to vector<1x1xf32>
    %313 = arith.addf %309, %312 : vector<1x1xf32>
    %314 = math.rsqrt %313 : vector<1x1xf32>
    %315 = vector.broadcast %314 : vector<1x1xf32> to vector<8x1xf32>
    %316 = arith.mulf %311, %315 : vector<8x1xf32>
    %317 = vector.extract_strided_slice %278 {offsets = [0, 0], sizes = [8, 1], strides = [1, 1]} : vector<8x3xf32> to vector<8x1xf32>
    %318 = vector.extract_strided_slice %278 {offsets = [0, 1], sizes = [8, 1], strides = [1, 1]} : vector<8x3xf32> to vector<8x1xf32>
    %319 = vector.extract_strided_slice %278 {offsets = [0, 2], sizes = [8, 1], strides = [1, 1]} : vector<8x3xf32> to vector<8x1xf32>
    %320 = arith.mulf %316, %318 : vector<8x1xf32>
    %321 = vector.broadcast %320 : vector<8x1xf32> to vector<8x256xf32>
    %322 = arith.addf %298, %321 : vector<8x256xf32>
    %323 = vector.broadcast %317 : vector<8x1xf32> to vector<8x256xf32>
    %324 = arith.mulf %323, %322 : vector<8x256xf32>
    %325 = vector.broadcast %319 : vector<8x1xf32> to vector<8x256xf32>
    %326 = arith.addf %324, %325 : vector<8x256xf32>
    %cst_192 = arith.constant 0.000000e+00 : f32
    %327 = vector.broadcast %cst_192 : f32 to vector<8x256xf32>
    %328 = arith.maximumf %326, %327 : vector<8x256xf32>
    %329 = vector.extract_strided_slice %275 {offsets = [0, 256], sizes = [8, 256], strides = [1, 1]} : vector<8x512xf32> to vector<8x256xf32>
    %c0_193 = arith.constant 0 : index
    %c8_194 = arith.constant 8 : index
    %c0_195 = arith.constant 0 : index
    %330 = vector.load %arg8[%c0_193, %c8_194, %c0_195] : memref<1x16x3xf32, #tpu.memory_space<vmem>>, vector<1x8x3xf32>
    %331 = vector.shape_cast %330 : vector<1x8x3xf32> to vector<8x3xf32>
    %cst_196 = arith.constant dense<0.000000e+00> : vector<8xf32>
    %332 = vector.multi_reduction <add>, %329, %cst_196 [1] : vector<8x256xf32> to vector<8xf32>
    %333 = vector.shape_cast %332 : vector<8xf32> to vector<8x1xf32>
    %334 = arith.mulf %329, %329 : vector<8x256xf32>
    %cst_197 = arith.constant dense<0.000000e+00> : vector<8xf32>
    %335 = vector.multi_reduction <add>, %334, %cst_197 [1] : vector<8x256xf32> to vector<8xf32>
    %336 = vector.shape_cast %335 : vector<8xf32> to vector<8x1xf32>
    %cst_198 = arith.constant 3.906250e-03 : f32
    %337 = vector.broadcast %cst_198 : f32 to vector<8x1xf32>
    %338 = arith.mulf %333, %337 : vector<8x1xf32>
    %cst_199 = arith.constant 3.906250e-03 : f32
    %339 = vector.broadcast %cst_199 : f32 to vector<8x1xf32>
    %340 = arith.mulf %336, %339 : vector<8x1xf32>
    %341 = arith.mulf %338, %338 : vector<8x1xf32>
    %342 = arith.subf %340, %341 : vector<8x1xf32>
    %cst_200 = arith.constant 0.000000e+00 : f32
    %343 = vector.broadcast %cst_200 : f32 to vector<8x1xf32>
    %344 = arith.maximumf %342, %343 : vector<8x1xf32>
    %345 = vector.broadcast %338 : vector<8x1xf32> to vector<8x256xf32>
    %346 = arith.subf %329, %345 : vector<8x256xf32>
    %cst_201 = arith.constant 9.99999974E-6 : f32
    %347 = vector.broadcast %cst_201 : f32 to vector<8x1xf32>
    %348 = arith.addf %344, %347 : vector<8x1xf32>
    %349 = math.rsqrt %348 : vector<8x1xf32>
    %350 = vector.broadcast %349 : vector<8x1xf32> to vector<8x256xf32>
    %351 = arith.mulf %346, %350 : vector<8x256xf32>
    %cst_202 = arith.constant dense<0.000000e+00> : vector<1xf32>
    %352 = vector.multi_reduction <add>, %338, %cst_202 [0] : vector<8x1xf32> to vector<1xf32>
    %353 = vector.shape_cast %352 : vector<1xf32> to vector<1x1xf32>
    %cst_203 = arith.constant 8.000000e+00 : f32
    %354 = vector.broadcast %cst_203 : f32 to vector<1x1xf32>
    %355 = arith.divf %353, %354 : vector<1x1xf32>
    %356 = vector.broadcast %355 : vector<1x1xf32> to vector<8x1xf32>
    %357 = arith.subf %338, %356 : vector<8x1xf32>
    %358 = arith.mulf %357, %357 : vector<8x1xf32>
    %cst_204 = arith.constant dense<0.000000e+00> : vector<1xf32>
    %359 = vector.multi_reduction <add>, %358, %cst_204 [0] : vector<8x1xf32> to vector<1xf32>
    %360 = vector.shape_cast %359 : vector<1xf32> to vector<1x1xf32>
    %cst_205 = arith.constant 7.000000e+00 : f32
    %361 = vector.broadcast %cst_205 : f32 to vector<1x1xf32>
    %362 = arith.divf %360, %361 : vector<1x1xf32>
    %363 = vector.broadcast %355 : vector<1x1xf32> to vector<8x1xf32>
    %364 = arith.subf %338, %363 : vector<8x1xf32>
    %cst_206 = arith.constant 9.99999974E-6 : f32
    %365 = vector.broadcast %cst_206 : f32 to vector<1x1xf32>
    %366 = arith.addf %362, %365 : vector<1x1xf32>
    %367 = math.rsqrt %366 : vector<1x1xf32>
    %368 = vector.broadcast %367 : vector<1x1xf32> to vector<8x1xf32>
    %369 = arith.mulf %364, %368 : vector<8x1xf32>
    %370 = vector.extract_strided_slice %331 {offsets = [0, 0], sizes = [8, 1], strides = [1, 1]} : vector<8x3xf32> to vector<8x1xf32>
    %371 = vector.extract_strided_slice %331 {offsets = [0, 1], sizes = [8, 1], strides = [1, 1]} : vector<8x3xf32> to vector<8x1xf32>
    %372 = vector.extract_strided_slice %331 {offsets = [0, 2], sizes = [8, 1], strides = [1, 1]} : vector<8x3xf32> to vector<8x1xf32>
    %373 = arith.mulf %369, %371 : vector<8x1xf32>
    %374 = vector.broadcast %373 : vector<8x1xf32> to vector<8x256xf32>
    %375 = arith.addf %351, %374 : vector<8x256xf32>
    %376 = vector.broadcast %370 : vector<8x1xf32> to vector<8x256xf32>
    %377 = arith.mulf %376, %375 : vector<8x256xf32>
    %378 = vector.broadcast %372 : vector<8x1xf32> to vector<8x256xf32>
    %379 = arith.addf %377, %378 : vector<8x256xf32>
    %cst_207 = arith.constant 0.000000e+00 : f32
    %380 = vector.broadcast %cst_207 : f32 to vector<8x256xf32>
    %381 = arith.maximumf %379, %380 : vector<8x256xf32>
    %382 = arith.addf %328, %88 : vector<8x256xf32>
    %c0_208 = arith.constant 0 : index
    %c0_209 = arith.constant 0 : index
    %c0_210 = arith.constant 0 : index
    %383 = vector.load %arg9[%c0_208, %c0_209, %c0_210] : memref<1x8x512xf32, #tpu.memory_space<vmem>>, vector<1x8x256xf32>
    %384 = vector.shape_cast %383 : vector<1x8x256xf32> to vector<8x256xf32>
    %385 = vector.shape_cast %382 : vector<8x256xf32> to vector<1x8x256xf32>
    tpu.vector_store %arg9[%c0_208, %c0_209, %c0_210], %385 {strides = array<i32>} : memref<1x8x512xf32, #tpu.memory_space<vmem>>, vector<1x8x256xf32>,
    %386 = arith.addf %381, %89 : vector<8x256xf32>
    %c0_211 = arith.constant 0 : index
    %c0_212 = arith.constant 0 : index
    %c256_213 = arith.constant 256 : index
    %387 = vector.load %arg9[%c0_211, %c0_212, %c256_213] : memref<1x8x512xf32, #tpu.memory_space<vmem>>, vector<1x8x256xf32>
    %388 = vector.shape_cast %387 : vector<1x8x256xf32> to vector<8x256xf32>
    %389 = vector.shape_cast %386 : vector<8x256xf32> to vector<1x8x256xf32>
    tpu.vector_store %arg9[%c0_211, %c0_212, %c256_213], %389 {strides = array<i32>} : memref<1x8x512xf32, #tpu.memory_space<vmem>>, vector<1x8x256xf32>,
    return
  }
  func.func @transform_0(%arg0: i32) -> (i32, i32, i32) {
    %c0_i32 = arith.constant 0 : i32
    %c0_i32_0 = arith.constant 0 : i32
    %c0_i32_1 = arith.constant 0 : i32
    return %arg0, %c0_i32, %c0_i32_0 : i32, i32, i32
  }
  func.func @transform_1(%arg0: i32) -> (i32, i32) {
    %c0_i32 = arith.constant 0 : i32
    %c0_i32_0 = arith.constant 0 : i32
    %c0_i32_1 = arith.constant 0 : i32
    return %c0_i32, %c0_i32_0 : i32, i32
  }
  func.func @transform_2(%arg0: i32) -> (i32, i32) {
    %c0_i32 = arith.constant 0 : i32
    %c0_i32_0 = arith.constant 0 : i32
    %c0_i32_1 = arith.constant 0 : i32
    return %c0_i32, %c0_i32_0 : i32, i32
  }
  func.func @transform_3(%arg0: i32) -> (i32, i32) {
    %c0_i32 = arith.constant 0 : i32
    %c0_i32_0 = arith.constant 0 : i32
    %c0_i32_1 = arith.constant 0 : i32
    return %c0_i32, %c0_i32_0 : i32, i32
  }
  func.func @transform_4(%arg0: i32) -> (i32, i32, i32) {
    %c0_i32 = arith.constant 0 : i32
    %c0_i32_0 = arith.constant 0 : i32
    %c0_i32_1 = arith.constant 0 : i32
    return %arg0, %c0_i32, %c0_i32_0 : i32, i32, i32
  }
  func.func @transform_5(%arg0: i32) -> (i32, i32) {
    %c0_i32 = arith.constant 0 : i32
    %c0_i32_0 = arith.constant 0 : i32
    %c0_i32_1 = arith.constant 0 : i32
    return %c0_i32, %c0_i32_0 : i32, i32
  }
  func.func @transform_6(%arg0: i32) -> (i32, i32) {
    %c0_i32 = arith.constant 0 : i32
    %c0_i32_0 = arith.constant 0 : i32
    %c0_i32_1 = arith.constant 0 : i32
    return %c0_i32, %c0_i32_0 : i32, i32
  }
  func.func @transform_7(%arg0: i32) -> (i32, i32, i32) {
    %c0_i32 = arith.constant 0 : i32
    %c0_i32_0 = arith.constant 0 : i32
    %c0_i32_1 = arith.constant 0 : i32
    return %arg0, %c0_i32, %c0_i32_0 : i32, i32, i32
  }
  func.func @transform_8(%arg0: i32) -> (i32, i32, i32) {
    %c0_i32 = arith.constant 0 : i32
    %c0_i32_0 = arith.constant 0 : i32
    %c0_i32_1 = arith.constant 0 : i32
    return %arg0, %c0_i32, %c0_i32_0 : i32, i32, i32
  }
}

</mosaic_0001>

<llo_original>
// kernel: conv_block_forward.1
$region0: #{conv_block_forward.1}
  #allocation0 [shape = 'u32[]', space=smem, size = 0x4, offset = 0x4, fixed_abs, tag = 'smem constant byte address 0x4 - core index']
  #allocation1 [shape = 'u32[144,128]{1,0:T(1,128)}', space=vmem, size = 0x12000, scoped, tag = 'internal scratch']
  #allocation2 [shape = 'f32[8,1024]{1,0:T(8,128)}', space=vmem, size = 0x8000, scoped, tag = 'scratch operand']
  #allocation3 [shape = 'f32[72,512]{1,0:T(8,128)}', space=vmem, size = 0x24000, scoped, tag = 'scratch operand']
  %s0 = inlined_call_operand.vmem [shape: f32[1,8,512], index: 0, kind: input, shape index: {}]
  %s1 = inlined_call_operand.vmem [shape: f32[6,256], index: 1, kind: input, shape index: {}]
  %s2 = inlined_call_operand.vmem [shape: f32[16,72], index: 2, kind: input, shape index: {}]
  %s3 = inlined_call_operand.vmem [shape: f32[16,1], index: 3, kind: input, shape index: {}]
  %s4 = inlined_call_operand.vmem [shape: f32[1,16,3], index: 4, kind: input, shape index: {}]
  %s5 = inlined_call_operand.vmem [shape: f32[8,72], index: 5, kind: input, shape index: {}]
  %s6 = inlined_call_operand.vmem [shape: f32[8,1], index: 6, kind: input, shape index: {}]
  %s7 = inlined_call_operand.vmem [shape: f32[1,16,3], index: 7, kind: input, shape index: {}]
  %s8 = inlined_call_operand.vmem [shape: f32[1,8,512], index: 8, kind: output, shape index: {}]
  %s9 = sld [smem:[#allocation0]]
  $region42: #{conv_block_forward.1} parent=0
    _
  %s11 = ssub.s32 1, %s9
  %s12 = scalar_select 0, %s11, %s9
  // Predicated region
  $region2: #{conv_block_forward.1} parent=0 // pred_check
    _
  $region3: #{conv_block_forward.1} parent=0 // pred_check_branch
    %14 = sbr.rel (0) target = $region5
  $region4: #{conv_block_forward.1} parent=0 // pred_region
    _
  $region5: #{conv_block_forward.1} parent=0 // pred_fallthru
    _
  // Predicated region
  $region6: #{conv_block_forward.1} parent=0 // pred_check
    _
  $region7: #{conv_block_forward.1} parent=0 // pred_check_branch
    %16 = sbr.rel (0) target = $region9
  $region8: #{conv_block_forward.1} parent=0 // pred_region
    _
  $region9: #{conv_block_forward.1} parent=0 // pred_fallthru
    _
  // Predicated region
  $region10: #{conv_block_forward.1} parent=0 // pred_check
    _
  $region11: #{conv_block_forward.1} parent=0 // pred_check_branch
    %18 = sbr.rel (0) target = $region13
  $region12: #{conv_block_forward.1} parent=0 // pred_region
    _
  $region13: #{conv_block_forward.1} parent=0 // pred_fallthru
    _
  // Predicated region
  $region14: #{conv_block_forward.1} parent=0 // pred_check
    _
  $region15: #{conv_block_forward.1} parent=0 // pred_check_branch
    %20 = sbr.rel (0) target = $region17
  $region16: #{conv_block_forward.1} parent=0 // pred_region
    _
  $region17: #{conv_block_forward.1} parent=0 // pred_fallthru
    _
  // Predicated region
  $region18: #{conv_block_forward.1} parent=0 // pred_check
    _
  $region19: #{conv_block_forward.1} parent=0 // pred_check_branch
    %22 = sbr.rel (0) target = $region21
  $region20: #{conv_block_forward.1} parent=0 // pred_region
    _
  $region21: #{conv_block_forward.1} parent=0 // pred_fallthru
    _
  // Predicated region
  $region22: #{conv_block_forward.1} parent=0 // pred_check
    _
  $region23: #{conv_block_forward.1} parent=0 // pred_check_branch
    %24 = sbr.rel (0) target = $region25
  $region24: #{conv_block_forward.1} parent=0 // pred_region
    _
  $region25: #{conv_block_forward.1} parent=0 // pred_fallthru
    _
  // Predicated region
  $region26: #{conv_block_forward.1} parent=0 // pred_check
    _
  $region27: #{conv_block_forward.1} parent=0 // pred_check_branch
    %26 = sbr.rel (0) target = $region29
  $region28: #{conv_block_forward.1} parent=0 // pred_region
    _
  $region29: #{conv_block_forward.1} parent=0 // pred_fallthru
    _
  // Predicated region
  $region30: #{conv_block_forward.1} parent=0 // pred_check
    _
  $region31: #{conv_block_forward.1} parent=0 // pred_check_branch
    %28 = sbr.rel (0) target = $region33
  $region32: #{conv_block_forward.1} parent=0 // pred_region
    _
  $region33: #{conv_block_forward.1} parent=0 // pred_fallthru
    _
  %29 = vst [vmem:[#allocation2] sm:$0xff] 0.0
  %30 = vst [vmem:[#allocation2 + $0x8] sm:$0xff] 0.0
  %31 = vst [vmem:[#allocation2 + $0x10] sm:$0xff] 0.0
  %32 = vst [vmem:[#allocation2 + $0x18] sm:$0xff] 0.0
  %33 = vst [vmem:[#allocation2 + $0x20] sm:$0xff] 0.0
  %34 = vst [vmem:[#allocation2 + $0x28] sm:$0xff] 0.0
  %35 = vst [vmem:[#allocation2 + $0x30] sm:$0xff] 0.0
  %36 = vst [vmem:[#allocation2 + $0x38] sm:$0xff] 0.0
  %v37 = vld [vmem:[%s1] sm:$0x3f]
  %v38 = vld [vmem:[%s1 + $0x8] sm:$0x3f]
  %v39 = vld [vmem:[%s0] sm:$0xff]
  %v40 = vld [vmem:[%s0 + $0x8] sm:$0xff]
  %v41 = vld [vmem:[%s0 + $0x10] sm:$0xff]
  %v42 = vld [vmem:[%s0 + $0x18] sm:$0xff]
  %43 = vst [vmem:[#allocation2 + $0x8] sm:$0xff] %v39
  %44 = vst [vmem:[#allocation2 + $0x10] sm:$0xff] %v40
  %45 = vst [vmem:[#allocation2 + $0x28] sm:$0xff] %v41
  %46 = vst [vmem:[#allocation2 + $0x30] sm:$0xff] %v42
  %v47 = vld [vmem:[#allocation2] sm:$0xff]
  %v48 = vld [vmem:[#allocation2 + $0x8] sm:$0xff]
  %v49 = vld [vmem:[#allocation2 + $0x10] sm:$0xff]
  %v50 = vlaneseq
  %v51 = vshrl.u32 %v50, 7
  %v52 = vsub.s32 0, %v51
  %v53 = vrot.slane %v37, %v52
  %v54 = vlaneseq
  %v55 = vshrl.u32 %v54, 7
  %v56 = vsub.s32 0, %v55
  %v57 = vrot.slane %v38, %v56
  %60 = vrot.lane.b32.xlu0 %v53, 111
  %v61 = vpop.permute.xlu0 %60
  %62 = vrot.lane.b32.xlu0 %v57, 111
  %v63 = vpop.permute.xlu0 %62
  %vm64 = vcmask 908288
  %v65 = vsel %vm64, %v61, %v63
  %v69 = vmul.f32 %v47, %v61
  %v70 = vmul.f32 %v48, %v65
  %v71 = vmul.f32 %v49, %v63
  %75 = vrot.lane.b32.xlu0 %v69, 17
  %v76 = vpop.permute.xlu0 %75
  %77 = vrot.lane.b32.xlu0 %v70, 17
  %v78 = vpop.permute.xlu0 %77
  %79 = vrot.lane.b32.xlu0 %v71, 17
  %v80 = vpop.permute.xlu0 %79
  %vm81 = vcmask 138240
  %v82 = vsel %vm81, %v76, %v78
  %v83 = vsel %vm81, %v78, %v80
  %86 = vst [vmem:[#allocation3] sm:$0xff] %v82
  %87 = vst [vmem:[#allocation3 + $0x8] sm:$0xff] %v83
  %v88 = vld [vmem:[#allocation2 + $0x20] sm:$0xff]
  %v89 = vld [vmem:[#allocation2 + $0x28] sm:$0xff]
  %v90 = vld [vmem:[#allocation2 + $0x30] sm:$0xff]
  %v91 = vmul.f32 %v88, %v61
  %v92 = vmul.f32 %v89, %v65
  %v93 = vmul.f32 %v90, %v63
  %97 = vrot.lane.b32.xlu0 %v91, 17
  %v98 = vpop.permute.xlu0 %97
  %99 = vrot.lane.b32.xlu0 %v92, 17
  %v100 = vpop.permute.xlu0 %99
  %101 = vrot.lane.b32.xlu0 %v93, 17
  %v102 = vpop.permute.xlu0 %101
  %v103 = vsel %vm81, %v98, %v100
  %v104 = vsel %vm81, %v100, %v102
  %107 = vst [vmem:[#allocation3 + $0x10] sm:$0xff] %v103
  %108 = vst [vmem:[#allocation3 + $0x18] sm:$0xff] %v104
  %v109 = vld [vmem:[#allocation2] sm:$0xff]
  %v110 = vld [vmem:[#allocation2 + $0x8] sm:$0xff]
  %v111 = vld [vmem:[#allocation2 + $0x10] sm:$0xff]
  %115 = vrot.lane.b32.xlu0 %v109, 16
  %v116 = vpop.permute.xlu0 %115
  %117 = vrot.lane.b32.xlu0 %v110, 16
  %v118 = vpop.permute.xlu0 %117
  %119 = vrot.lane.b32.xlu0 %v111, 16
  %v120 = vpop.permute.xlu0 %119
  %vm121 = vcmask 130048
  %v122 = vsel %vm121, %v116, %v118
  %v123 = vsel %vm121, %v118, %v120
  %126 = vst [vmem:[#allocation3 + $0x20] sm:$0xff] %v122
  %127 = vst [vmem:[#allocation3 + $0x28] sm:$0xff] %v123
  %v128 = vld [vmem:[#allocation2 + $0x20] sm:$0xff]
  %v129 = vld [vmem:[#allocation2 + $0x28] sm:$0xff]
  %v130 = vld [vmem:[#allocation2 + $0x30] sm:$0xff]
  %134 = vrot.lane.b32.xlu0 %v128, 16
  %v135 = vpop.permute.xlu0 %134
  %136 = vrot.lane.b32.xlu0 %v129, 16
  %v137 = vpop.permute.xlu0 %136
  %138 = vrot.lane.b32.xlu0 %v130, 16
  %v139 = vpop.permute.xlu0 %138
  %v140 = vsel %vm121, %v135, %v137
  %v141 = vsel %vm121, %v137, %v139
  %144 = vst [vmem:[#allocation3 + $0x30] sm:$0xff] %v140
  %145 = vst [vmem:[#allocation3 + $0x38] sm:$0xff] %v141
  %v146 = vld [vmem:[#allocation2] sm:$0xff]
  %v147 = vld [vmem:[#allocation2 + $0x8] sm:$0xff]
  %v148 = vld [vmem:[#allocation2 + $0x10] sm:$0xff]
  %v149 = vlaneseq
  %v150 = vshrl.u32 %v149, 7
  %v151 = vsub.s32 1, %v150
  %v152 = vrot.slane %v37, %v151
  %v153 = vlaneseq
  %v154 = vshrl.u32 %v153, 7
  %v155 = vsub.s32 1, %v154
  %v156 = vrot.slane %v38, %v155
  %159 = vrot.lane.b32.xlu0 %v152, 113
  %v160 = vpop.permute.xlu0 %159
  %161 = vrot.lane.b32.xlu0 %v156, 113
  %v162 = vpop.permute.xlu0 %161
  %vm163 = vcmask 924672
  %v164 = vsel %vm163, %v160, %v162
  %v168 = vmul.f32 %v146, %v160
  %v169 = vmul.f32 %v147, %v164
  %v170 = vmul.f32 %v148, %v162
  %174 = vrot.lane.b32.xlu0 %v168, 15
  %v175 = vpop.permute.xlu0 %174
  %176 = vrot.lane.b32.xlu0 %v169, 15
  %v177 = vpop.permute.xlu0 %176
  %178 = vrot.lane.b32.xlu0 %v170, 15
  %v179 = vpop.permute.xlu0 %178
  %vm180 = vcmask 121856
  %v181 = vsel %vm180, %v175, %v177
  %v182 = vsel %vm180, %v177, %v179
  %185 = vst [vmem:[#allocation3 + $0x40] sm:$0xff] %v181
  %186 = vst [vmem:[#allocation3 + $0x48] sm:$0xff] %v182
  %v187 = vld [vmem:[#allocation2 + $0x20] sm:$0xff]
  %v188 = vld [vmem:[#allocation2 + $0x28] sm:$0xff]
  %v189 = vld [vmem:[#allocation2 + $0x30] sm:$0xff]
  %v190 = vmul.f32 %v187, %v160
  %v191 = vmul.f32 %v188, %v164
  %v192 = vmul.f32 %v189, %v162
  %196 = vrot.lane.b32.xlu0 %v190, 15
  %v197 = vpop.permute.xlu0 %196
  %198 = vrot.lane.b32.xlu0 %v191, 15
  %v199 = vpop.permute.xlu0 %198
  %200 = vrot.lane.b32.xlu0 %v192, 15
  %v201 = vpop.permute.xlu0 %200
  %v202 = vsel %vm180, %v197, %v199
  %v203 = vsel %vm180, %v199, %v201
  %206 = vst [vmem:[#allocation3 + $0x50] sm:$0xff] %v202
  %207 = vst [vmem:[#allocation3 + $0x58] sm:$0xff] %v203
  %v208 = vld [vmem:[#allocation2] sm:$0xff]
  %v209 = vld [vmem:[#allocation2 + $0x8] sm:$0xff]
  %v210 = vld [vmem:[#allocation2 + $0x10] sm:$0xff]
  %v211 = vlaneseq
  %v212 = vshrl.u32 %v211, 7
  %v213 = vsub.s32 2, %v212
  %v214 = vrot.slane %v37, %v213
  %v215 = vlaneseq
  %v216 = vshrl.u32 %v215, 7
  %v217 = vsub.s32 2, %v216
  %v218 = vrot.slane %v38, %v217
  %221 = vrot.lane.b32.xlu0 %v214, 127
  %v222 = vpop.permute.xlu0 %221
  %223 = vrot.lane.b32.xlu0 %v218, 127
  %v224 = vpop.permute.xlu0 %223
  %vm225 = vcmask 1039360
  %v226 = vsel %vm225, %v222, %v224
  %v230 = vmul.f32 %v208, %v222
  %v231 = vmul.f32 %v209, %v226
  %v232 = vmul.f32 %v210, %v224
  %236 = vrot.lane.b32.xlu0 %v230, 1
  %v237 = vpop.permute.xlu0 %236
  %238 = vrot.lane.b32.xlu0 %v231, 1
  %v239 = vpop.permute.xlu0 %238
  %240 = vrot.lane.b32.xlu0 %v232, 1
  %v241 = vpop.permute.xlu0 %240
  %vm242 = vcmask 7168
  %v243 = vsel %vm242, %v237, %v239
  %v244 = vsel %vm242, %v239, %v241
  %247 = vst [vmem:[#allocation3 + $0x60] sm:$0xff] %v243
  %248 = vst [vmem:[#allocation3 + $0x68] sm:$0xff] %v244
  %v249 = vld [vmem:[#allocation2 + $0x20] sm:$0xff]
  %v250 = vld [vmem:[#allocation2 + $0x28] sm:$0xff]
  %v251 = vld [vmem:[#allocation2 + $0x30] sm:$0xff]
  %v252 = vmul.f32 %v249, %v222
  %v253 = vmul.f32 %v250, %v226
  %v254 = vmul.f32 %v251, %v224
  %258 = vrot.lane.b32.xlu0 %v252, 1
  %v259 = vpop.permute.xlu0 %258
  %260 = vrot.lane.b32.xlu0 %v253, 1
  %v261 = vpop.permute.xlu0 %260
  %262 = vrot.lane.b32.xlu0 %v254, 1
  %v263 = vpop.permute.xlu0 %262
  %v264 = vsel %vm242, %v259, %v261
  %v265 = vsel %vm242, %v261, %v263
  %268 = vst [vmem:[#allocation3 + $0x70] sm:$0xff] %v264
  %269 = vst [vmem:[#allocation3 + $0x78] sm:$0xff] %v265
  %v270 = vld [vmem:[#allocation2 + $0x8] sm:$0xff]
  %v271 = vld [vmem:[#allocation2 + $0x10] sm:$0xff]
  %272 = vst [vmem:[#allocation3 + $0x80] sm:$0xff] %v270
  %273 = vst [vmem:[#allocation3 + $0x88] sm:$0xff] %v271
  %v274 = vld [vmem:[#allocation2 + $0x28] sm:$0xff]
  %v275 = vld [vmem:[#allocation2 + $0x30] sm:$0xff]
  %276 = vst [vmem:[#allocation3 + $0x90] sm:$0xff] %v274
  %277 = vst [vmem:[#allocation3 + $0x98] sm:$0xff] %v275
  %v278 = vld [vmem:[#allocation2 + $0x8] sm:$0xff]
  %v279 = vld [vmem:[#allocation2 + $0x10] sm:$0xff]
  %v280 = vld [vmem:[#allocation2 + $0x18] sm:$0xff]
  %v281 = vlaneseq
  %v282 = vshrl.u32 %v281, 7
  %v283 = vsub.s32 3, %v282
  %v284 = vrot.slane %v37, %v283
  %v285 = vlaneseq
  %v286 = vshrl.u32 %v285, 7
  %v287 = vsub.s32 3, %v286
  %v288 = vrot.slane %v38, %v287
  %291 = vrot.lane.b32.xlu0 %v284, 1
  %v292 = vpop.permute.xlu0 %291
  %293 = vrot.lane.b32.xlu0 %v288, 1
  %v294 = vpop.permute.xlu0 %293
  %v295 = vsel %vm242, %v292, %v294
  %v299 = vmul.f32 %v278, %v292
  %v300 = vmul.f32 %v279, %v295
  %v301 = vmul.f32 %v280, %v294
  %305 = vrot.lane.b32.xlu0 %v299, 127
  %v306 = vpop.permute.xlu0 %305
  %307 = vrot.lane.b32.xlu0 %v300, 127
  %v308 = vpop.permute.xlu0 %307
  %309 = vrot.lane.b32.xlu0 %v301, 127
  %v310 = vpop.permute.xlu0 %309
  %v311 = vsel %vm225, %v306, %v308
  %v312 = vsel %vm225, %v308, %v310
  %315 = vst [vmem:[#allocation3 + $0xa0] sm:$0xff] %v311
  %316 = vst [vmem:[#allocation3 + $0xa8] sm:$0xff] %v312
  %v317 = vld [vmem:[#allocation2 + $0x28] sm:$0xff]
  %v318 = vld [vmem:[#allocation2 + $0x30] sm:$0xff]
  %v319 = vld [vmem:[#allocation2 + $0x38] sm:$0xff]
  %v320 = vmul.f32 %v317, %v292
  %v321 = vmul.f32 %v318, %v295
  %v322 = vmul.f32 %v319, %v294
  %326 = vrot.lane.b32.xlu0 %v320, 127
  %v327 = vpop.permute.xlu0 %326
  %328 = vrot.lane.b32.xlu0 %v321, 127
  %v329 = vpop.permute.xlu0 %328
  %330 = vrot.lane.b32.xlu0 %v322, 127
  %v331 = vpop.permute.xlu0 %330
  %v332 = vsel %vm225, %v327, %v329
  %v333 = vsel %vm225, %v329, %v331
  %336 = vst [vmem:[#allocation3 + $0xb0] sm:$0xff] %v332
  %337 = vst [vmem:[#allocation3 + $0xb8] sm:$0xff] %v333
  %v338 = vld [vmem:[#allocation2 + $0x8] sm:$0xff]
  %v339 = vld [vmem:[#allocation2 + $0x10] sm:$0xff]
  %v340 = vld [vmem:[#allocation2 + $0x18] sm:$0xff]
  %v341 = vlaneseq
  %v342 = vshrl.u32 %v341, 7
  %v343 = vsub.s32 4, %v342
  %v344 = vrot.slane %v37, %v343
  %v345 = vlaneseq
  %v346 = vshrl.u32 %v345, 7
  %v347 = vsub.s32 4, %v346
  %v348 = vrot.slane %v38, %v347
  %351 = vrot.lane.b32.xlu0 %v344, 15
  %v352 = vpop.permute.xlu0 %351
  %353 = vrot.lane.b32.xlu0 %v348, 15
  %v354 = vpop.permute.xlu0 %353
  %v355 = vsel %vm180, %v352, %v354
  %v359 = vmul.f32 %v338, %v352
  %v360 = vmul.f32 %v339, %v355
  %v361 = vmul.f32 %v340, %v354
  %365 = vrot.lane.b32.xlu0 %v359, 113
  %v366 = vpop.permute.xlu0 %365
  %367 = vrot.lane.b32.xlu0 %v360, 113
  %v368 = vpop.permute.xlu0 %367
  %369 = vrot.lane.b32.xlu0 %v361, 113
  %v370 = vpop.permute.xlu0 %369
  %v371 = vsel %vm163, %v366, %v368
  %v372 = vsel %vm163, %v368, %v370
  %375 = vst [vmem:[#allocation3 + $0xc0] sm:$0xff] %v371
  %376 = vst [vmem:[#allocation3 + $0xc8] sm:$0xff] %v372
  %v377 = vld [vmem:[#allocation2 + $0x28] sm:$0xff]
  %v378 = vld [vmem:[#allocation2 + $0x30] sm:$0xff]
  %v379 = vld [vmem:[#allocation2 + $0x38] sm:$0xff]
  %v380 = vmul.f32 %v377, %v352
  %v381 = vmul.f32 %v378, %v355
  %v382 = vmul.f32 %v379, %v354
  %386 = vrot.lane.b32.xlu0 %v380, 113
  %v387 = vpop.permute.xlu0 %386
  %388 = vrot.lane.b32.xlu0 %v381, 113
  %v389 = vpop.permute.xlu0 %388
  %390 = vrot.lane.b32.xlu0 %v382, 113
  %v391 = vpop.permute.xlu0 %390
  %v392 = vsel %vm163, %v387, %v389
  %v393 = vsel %vm163, %v389, %v391
  %396 = vst [vmem:[#allocation3 + $0xd0] sm:$0xff] %v392
  %397 = vst [vmem:[#allocation3 + $0xd8] sm:$0xff] %v393
  %v398 = vld [vmem:[#allocation2 + $0x8] sm:$0xff]
  %v399 = vld [vmem:[#allocation2 + $0x10] sm:$0xff]
  %v400 = vld [vmem:[#allocation2 + $0x18] sm:$0xff]
  %404 = vrot.lane.b32.xlu0 %v398, 112
  %v405 = vpop.permute.xlu0 %404
  %406 = vrot.lane.b32.xlu0 %v399, 112
  %v407 = vpop.permute.xlu0 %406
  %408 = vrot.lane.b32.xlu0 %v400, 112
  %v409 = vpop.permute.xlu0 %408
  %vm410 = vcmask 916480
  %v411 = vsel %vm410, %v405, %v407
  %v412 = vsel %vm410, %v407, %v409
  %415 = vst [vmem:[#allocation3 + $0xe0] sm:$0xff] %v411
  %416 = vst [vmem:[#allocation3 + $0xe8] sm:$0xff] %v412
  %v417 = vld [vmem:[#allocation2 + $0x28] sm:$0xff]
  %v418 = vld [vmem:[#allocation2 + $0x30] sm:$0xff]
  %v419 = vld [vmem:[#allocation2 + $0x38] sm:$0xff]
  %423 = vrot.lane.b32.xlu0 %v417, 112
  %v424 = vpop.permute.xlu0 %423
  %425 = vrot.lane.b32.xlu0 %v418, 112
  %v426 = vpop.permute.xlu0 %425
  %427 = vrot.lane.b32.xlu0 %v419, 112
  %v428 = vpop.permute.xlu0 %427
  %v429 = vsel %vm410, %v424, %v426
  %v430 = vsel %vm410, %v426, %v428
  %433 = vst [vmem:[#allocation3 + $0xf0] sm:$0xff] %v429
  %434 = vst [vmem:[#allocation3 + $0xf8] sm:$0xff] %v430
  %v435 = vld [vmem:[#allocation2 + $0x8] sm:$0xff]
  %v436 = vld [vmem:[#allocation2 + $0x10] sm:$0xff]
  %v437 = vld [vmem:[#allocation2 + $0x18] sm:$0xff]
  %v438 = vlaneseq
  %v439 = vshrl.u32 %v438, 7
  %v440 = vsub.s32 5, %v439
  %v441 = vrot.slane %v37, %v440
  %v442 = vlaneseq
  %v443 = vshrl.u32 %v442, 7
  %v444 = vsub.s32 5, %v443
  %v445 = vrot.slane %v38, %v444
  %448 = vrot.lane.b32.xlu0 %v441, 17
  %v449 = vpop.permute.xlu0 %448
  %450 = vrot.lane.b32.xlu0 %v445, 17
  %v451 = vpop.permute.xlu0 %450
  %v452 = vsel %vm81, %v449, %v451
  %v456 = vmul.f32 %v435, %v449
  %v457 = vmul.f32 %v436, %v452
  %v458 = vmul.f32 %v437, %v451
  %462 = vrot.lane.b32.xlu0 %v456, 111
  %v463 = vpop.permute.xlu0 %462
  %464 = vrot.lane.b32.xlu0 %v457, 111
  %v465 = vpop.permute.xlu0 %464
  %466 = vrot.lane.b32.xlu0 %v458, 111
  %v467 = vpop.permute.xlu0 %466
  %v468 = vsel %vm64, %v463, %v465
  %v469 = vsel %vm64, %v465, %v467
  %472 = vst [vmem:[#allocation3 + $0x100] sm:$0xff] %v468
  %473 = vst [vmem:[#allocation3 + $0x108] sm:$0xff] %v469
  %v474 = vld [vmem:[#allocation2 + $0x28] sm:$0xff]
  %v475 = vld [vmem:[#allocation2 + $0x30] sm:$0xff]
  %v476 = vld [vmem:[#allocation2 + $0x38] sm:$0xff]
  %v477 = vmul.f32 %v474, %v449
  %v478 = vmul.f32 %v475, %v452
  %v479 = vmul.f32 %v476, %v451
  %483 = vrot.lane.b32.xlu0 %v477, 111
  %v484 = vpop.permute.xlu0 %483
  %485 = vrot.lane.b32.xlu0 %v478, 111
  %v486 = vpop.permute.xlu0 %485
  %487 = vrot.lane.b32.xlu0 %v479, 111
  %v488 = vpop.permute.xlu0 %487
  %v489 = vsel %vm64, %v484, %v486
  %v490 = vsel %vm64, %v486, %v488
  %493 = vst [vmem:[#allocation3 + $0x110] sm:$0xff] %v489
  %494 = vst [vmem:[#allocation3 + $0x118] sm:$0xff] %v490
  %v495 = vld [vmem:[%s2] sm:$0xff]
  %v496 = vld [vmem:[%s2 + $0x8] sm:$0xff]
  %v497 = vld [vmem:[#allocation3] sm:$0xff]
  %v498 = vld [vmem:[#allocation3 + $0x8] sm:$0xff]
  %v499 = vld [vmem:[#allocation3 + $0x10] sm:$0xff]
  %v500 = vld [vmem:[#allocation3 + $0x18] sm:$0xff]
  %v501 = vld [vmem:[#allocation3 + $0x20] sm:$0xff]
  %v502 = vld [vmem:[#allocation3 + $0x28] sm:$0xff]
  %v503 = vld [vmem:[#allocation3 + $0x30] sm:$0xff]
  %v504 = vld [vmem:[#allocation3 + $0x38] sm:$0xff]
  %v505 = vld [vmem:[#allocation3 + $0x40] sm:$0xff]
  %v506 = vld [vmem:[#allocation3 + $0x48] sm:$0xff]
  %v507 = vld [vmem:[#allocation3 + $0x50] sm:$0xff]
  %v508 = vld [vmem:[#allocation3 + $0x58] sm:$0xff]
  %v509 = vld [vmem:[#allocation3 + $0x60] sm:$0xff]
  %v510 = vld [vmem:[#allocation3 + $0x68] sm:$0xff]
  %v511 = vld [vmem:[#allocation3 + $0x70] sm:$0xff]
  %v512 = vld [vmem:[#allocation3 + $0x78] sm:$0xff]
  %v513 = vld [vmem:[#allocation3 + $0x80] sm:$0xff]
  %v514 = vld [vmem:[#allocation3 + $0x88] sm:$0xff]
  %v515 = vld [vmem:[#allocation3 + $0x90] sm:$0xff]
  %v516 = vld [vmem:[#allocation3 + $0x98] sm:$0xff]
  %v517 = vld [vmem:[#allocation3 + $0xa0] sm:$0xff]
  %v518 = vld [vmem:[#allocation3 + $0xa8] sm:$0xff]
  %v519 = vld [vmem:[#allocation3 + $0xb0] sm:$0xff]
  %v520 = vld [vmem:[#allocation3 + $0xb8] sm:$0xff]
  %v521 = vld [vmem:[#allocation3 + $0xc0] sm:$0xff]
  %v522 = vld [vmem:[#allocation3 + $0xc8] sm:$0xff]
  %v523 = vld [vmem:[#allocation3 + $0xd0] sm:$0xff]
  %v524 = vld [vmem:[#allocation3 + $0xd8] sm:$0xff]
  %v525 = vld [vmem:[#allocation3 + $0xe0] sm:$0xff]
  %v526 = vld [vmem:[#allocation3 + $0xe8] sm:$0xff]
  %v527 = vld [vmem:[#allocation3 + $0xf0] sm:$0xff]
  %v528 = vld [vmem:[#allocation3 + $0xf8] sm:$0xff]
  %v529 = vld [vmem:[#allocation3 + $0x100] sm:$0xff]
  %v530 = vld [vmem:[#allocation3 + $0x108] sm:$0xff]
  %v531 = vld [vmem:[#allocation3 + $0x110] sm:$0xff]
  %v532 = vld [vmem:[#allocation3 + $0x118] sm:$0xff]
  %v533 = vld [vmem:[%s3] sm:$0xff]
  %v534 = vld [vmem:[%s3 + $0x8] sm:$0xff]
  %536 = vset.pattern.permute.xlu0 0
  %537 = vperm.xlu0 %536, %v533
  %v538 = vpop.permute.xlu0 %537
  %541 = vset.pattern.permute.xlu0 0
  %542 = vperm.xlu0 %541, %v534
  %v543 = vpop.permute.xlu0 %542
  %vm545 = vcmask 588800
  %v547 = vsel %vm545, %v495, 0
  %v550 = vsel %vm545, %v496, 0
  %552 = vmatprep.subr.mxu0 %v498
  %553 = vmatpush1.msra.mxu0 %v497
  %554 = vmatprep.subr.mxu0 %v502
  %555 = vmatpush1.msra.mxu0 %v501
  %556 = vmatprep.subr.mxu0 %v506
  %557 = vmatpush1.msra.mxu0 %v505
  %558 = vmatprep.subr.mxu0 %v510
  %559 = vmatpush1.msra.mxu0 %v509
  %560 = vmatprep.subr.mxu0 %v514
  %561 = vmatpush1.msra.mxu0 %v513
  %562 = vmatprep.subr.mxu0 %v518
  %563 = vmatpush1.msra.mxu0 %v517
  %564 = vmatprep.subr.mxu0 %v522
  %565 = vmatpush1.msra.mxu0 %v521
  %566 = vmatprep.subr.mxu0 %v526
  %567 = vmatpush1.msra.mxu0 %v525
  %568 = vmatprep.subr.mxu0 %v530
  %569 = vmatpush1.msra.mxu0 %v529
  %570 = vmatprep.subr.mxu0 0.0
  %571 = vmatpush1.msra.mxu0 0.0
  %572 = vmatprep.subr.mxu0 0.0
  %573 = vmatpush1.msra.mxu0 0.0
  %574 = vmatprep.subr.mxu0 0.0
  %575 = vmatpush1.msra.mxu0 0.0
  %576 = vmatprep.subr.mxu0 0.0
  %577 = vmatpush1.msra.mxu0 0.0
  %578 = vmatprep.subr.mxu0 0.0
  %579 = vmatpush1.msra.mxu0 0.0
  %580 = vmatprep.subr.mxu0 0.0
  %581 = vmatpush1.msra.mxu0 0.0
  %582 = vmatprep.subr.mxu0 0.0
  %583 = vmatpush1.msra.mxu0 0.0
  %584 = vmatprep.subr.mxu0 0.0
  %585 = vmatpush1.msra.mxu0 0.0
  %586 = vmatprep.subr.mxu0 0.0
  %587 = vmatpush1.msra.mxu0 0.0
  %588 = vmatprep.subr.mxu0 0.0
  %589 = vmatpush1.msra.mxu0 0.0
  %590 = vmatprep.subr.mxu0 0.0
  %591 = vmatpush1.msra.mxu0 0.0
  %592 = vmatprep.subr.mxu0 0.0
  %593 = vmatpush1.msra.mxu0 0.0
  %594 = vmatprep.subr.mxu0 0.0
  %595 = vmatpush1.msra.mxu0 0.0
  %596 = vmatprep.subr.mxu0 0.0
  %597 = vmatpush1.msra.mxu0 0.0
  %598 = vmatprep.subr.mxu0 0.0
  %599 = vmatpush1.msra.mxu0 0.0
  %600 = vmatprep.subr.mxu0 0.0
  %601 = vmatpush1.msra.mxu0 0.0
  %602 = vmatprep.subr.mxu0 0.0
  %603 = vmatpush1.msra.mxu0 0.0
  %604 = vmatprep.subr.mxu0 0.0
  %605 = vmatpush1.msra.mxu0 0.0
  %606 = vmatprep.subr.mxu0 0.0
  %607 = vmatpush1.msra.mxu0 0.0
  %608 = vmatprep.subr.mxu0 0.0
  %609 = vmatpush1.msra.mxu0 0.0
  %610 = vmatprep.subr.mxu0 0.0
  %611 = vmatpush1.msra.mxu0 0.0
  %612 = vmatprep.subr.mxu0 0.0
  %613 = vmatpush1.msra.mxu0 0.0
  %614 = vmatprep.subr.mxu0 0.0
  %615 = vmatpush1.msra.mxu0 0.0
  %616 = vmatprep.mubr.f32.mxu0 0.0
  %617 = vmatmul.mubr.f32.gmra.mrb[0].mxu0 %v547
  %v618 = vpop.f32.mrb[0].mxu0
  %v619 = vadd.f32 %v538, %v618
  %v620 = vpop.f32.mrb[0].mxu0
  %v621 = vadd.f32 %v538, %v620
  %622 = vmatprep.mubr.f32.mxu0 0.0
  %623 = vmatmul.mubr.f32.gmra.mrb[0].mxu0 %v550
  %v624 = vpop.f32.mrb[0].mxu0
  %v625 = vadd.f32 %v543, %v624
  %v626 = vpop.f32.mrb[0].mxu0
  %v627 = vadd.f32 %v543, %v626
  %628 = vdwg.mxu0
  %629 = vmatprep.subr.mxu0 %v500
  %630 = vmatpush1.msra.mxu0 %v499
  %631 = vmatprep.subr.mxu0 %v504
  %632 = vmatpush1.msra.mxu0 %v503
  %633 = vmatprep.subr.mxu0 %v508
  %634 = vmatpush1.msra.mxu0 %v507
  %635 = vmatprep.subr.mxu0 %v512
  %636 = vmatpush1.msra.mxu0 %v511
  %637 = vmatprep.subr.mxu0 %v516
  %638 = vmatpush1.msra.mxu0 %v515
  %639 = vmatprep.subr.mxu0 %v520
  %640 = vmatpush1.msra.mxu0 %v519
  %641 = vmatprep.subr.mxu0 %v524
  %642 = vmatpush1.msra.mxu0 %v523
  %643 = vmatprep.subr.mxu0 %v528
  %644 = vmatpush1.msra.mxu0 %v527
  %645 = vmatprep.subr.mxu0 %v532
  %646 = vmatpush1.msra.mxu0 %v531
  %647 = vmatprep.subr.mxu0 0.0
  %648 = vmatpush1.msra.mxu0 0.0
  %649 = vmatprep.subr.mxu0 0.0
  %650 = vmatpush1.msra.mxu0 0.0
  %651 = vmatprep.subr.mxu0 0.0
  %652 = vmatpush1.msra.mxu0 0.0
  %653 = vmatprep.subr.mxu0 0.0
  %654 = vmatpush1.msra.mxu0 0.0
  %655 = vmatprep.subr.mxu0 0.0
  %656 = vmatpush1.msra.mxu0 0.0
  %657 = vmatprep.subr.mxu0 0.0
  %658 = vmatpush1.msra.mxu0 0.0
  %659 = vmatprep.subr.mxu0 0.0
  %660 = vmatpush1.msra.mxu0 0.0
  %661 = vmatprep.subr.mxu0 0.0
  %662 = vmatpush1.msra.mxu0 0.0
  %663 = vmatprep.subr.mxu0 0.0
  %664 = vmatpush1.msra.mxu0 0.0
  %665 = vmatprep.subr.mxu0 0.0
  %666 = vmatpush1.msra.mxu0 0.0
  %667 = vmatprep.subr.mxu0 0.0
  %668 = vmatpush1.msra.mxu0 0.0
  %669 = vmatprep.subr.mxu0 0.0
  %670 = vmatpush1.msra.mxu0 0.0
  %671 = vmatprep.subr.mxu0 0.0
  %672 = vmatpush1.msra.mxu0 0.0
  %673 = vmatprep.subr.mxu0 0.0
  %674 = vmatpush1.msra.mxu0 0.0
  %675 = vmatprep.subr.mxu0 0.0
  %676 = vmatpush1.msra.mxu0 0.0
  %677 = vmatprep.subr.mxu0 0.0
  %678 = vmatpush1.msra.mxu0 0.0
  %679 = vmatprep.subr.mxu0 0.0
  %680 = vmatpush1.msra.mxu0 0.0
  %681 = vmatprep.subr.mxu0 0.0
  %682 = vmatpush1.msra.mxu0 0.0
  %683 = vmatprep.subr.mxu0 0.0
  %684 = vmatpush1.msra.mxu0 0.0
  %685 = vmatprep.subr.mxu0 0.0
  %686 = vmatpush1.msra.mxu0 0.0
  %687 = vmatprep.subr.mxu0 0.0
  %688 = vmatpush1.msra.mxu0 0.0
  %689 = vmatprep.subr.mxu0 0.0
  %690 = vmatpush1.msra.mxu0 0.0
  %691 = vmatprep.subr.mxu0 0.0
  %692 = vmatpush1.msra.mxu0 0.0
  %693 = vmatprep.mubr.f32.mxu0 0.0
  %694 = vmatmul.mubr.f32.gmra.mrb[0].mxu0 %v547
  %v695 = vpop.f32.mrb[0].mxu0
  %v696 = vadd.f32 %v538, %v695
  %v697 = vpop.f32.mrb[0].mxu0
  %v698 = vadd.f32 %v538, %v697
  %699 = vmatprep.mubr.f32.mxu0 0.0
  %700 = vmatmul.mubr.f32.gmra.mrb[0].mxu0 %v550
  %v701 = vpop.f32.mrb[0].mxu0
  %v702 = vadd.f32 %v543, %v701
  %v703 = vpop.f32.mrb[0].mxu0
  %v704 = vadd.f32 %v543, %v703
  %705 = vdwg.mxu0
  %v706 = vld [vmem:[%s4] sm:$0xff]
  %v707 = vadd.f32 %v619, %v621
  %708 = vadd.xlane.f32.xlu0 %v707
  %v709 = vpop.xlane.xlu0 %708
  %v710 = vmul.f32 %v619, %v619
  %v711 = vmul.f32 %v621, %v621
  %v712 = vadd.f32 %v710, %v711
  %713 = vadd.xlane.f32.xlu0 %v712
  %v714 = vpop.xlane.xlu0 %713
  %v715 = vmul.f32 %v709, 0.00390625
  %v716 = vmul.f32 %v714, 0.00390625
  %v717 = vmul.f32 %v715, %v715
  %v718 = vsub.f32 %v716, %v717
  %v719 = vmax.f32 %v718, 0.0
  %v720 = vsub.f32 %v619, %v715
  %v721 = vsub.f32 %v621, %v715
  %v722 = vadd.f32 %v719, 1e-05
  %v723 = vrsqrt.pop %v722
  %v724 = vmul.f32 %v720, %v723
  %v725 = vmul.f32 %v721, %v723
  %v726 = vrot.slane %v715, 4
  %v727 = vadd.f32 %v715, %v726
  %v728 = vrot.slane %v727, 2
  %v729 = vadd.f32 %v727, %v728
  %v730 = vrot.slane %v729, 1
  %v731 = vadd.f32 %v729, %v730
  %v732 = vrcp.pop 8.0
  %v733 = vmul.f32 %v731, %v732
  %v734 = vsub.f32 %v715, %v733
  %v735 = vmul.f32 %v734, %v734
  %v736 = vrot.slane %v735, 4
  %v737 = vadd.f32 %v735, %v736
  %v738 = vrot.slane %v737, 2
  %v739 = vadd.f32 %v737, %v738
  %v740 = vrot.slane %v739, 1
  %v741 = vadd.f32 %v739, %v740
  %v742 = vrcp.pop 7.0
  %v743 = vmul.f32 %v741, %v742
  %v744 = vadd.f32 %v743, 1e-05
  %v745 = vrsqrt.pop %v744
  %v746 = vmul.f32 %v734, %v745
  %v747 = vmul.f32 %v746, %v706
  %749 = vset.pattern.permute.xlu0 1
  %750 = vperm.xlu0 %749, %v747
  %v751 = vpop.permute.xlu0 %750
  %v753 = vadd.f32 %v724, %v751
  %v754 = vadd.f32 %v725, %v751
  %756 = vset.pattern.permute.xlu0 0
  %757 = vperm.xlu0 %756, %v706
  %v758 = vpop.permute.xlu0 %757
  %v760 = vmul.f32 %v758, %v753
  %v761 = vmul.f32 %v758, %v754
  %762 = vset.pattern.permute.xlu0 2
  %763 = vperm.xlu0 %762, %v706
  %v764 = vpop.permute.xlu0 %763
  %v766 = vadd.f32 %v760, %v764
  %v767 = vadd.f32 %v761, %v764
  %v768 = vmax.f32 %v766, 0.0
  %v769 = vmax.f32 %v767, 0.0
  %v770 = vld [vmem:[%s4 + $0x8] sm:$0xff]
  %v771 = vadd.f32 %v696, %v698
  %772 = vadd.xlane.f32.xlu0 %v771
  %v773 = vpop.xlane.xlu0 %772
  %v774 = vmul.f32 %v696, %v696
  %v775 = vmul.f32 %v698, %v698
  %v776 = vadd.f32 %v774, %v775
  %777 = vadd.xlane.f32.xlu0 %v776
  %v778 = vpop.xlane.xlu0 %777
  %v779 = vmul.f32 %v773, 0.00390625
  %v780 = vmul.f32 %v778, 0.00390625
  %v781 = vmul.f32 %v779, %v779
  %v782 = vsub.f32 %v780, %v781
  %v783 = vmax.f32 %v782, 0.0
  %v784 = vsub.f32 %v696, %v779
  %v785 = vsub.f32 %v698, %v779
  %v786 = vadd.f32 %v783, 1e-05
  %v787 = vrsqrt.pop %v786
  %v788 = vmul.f32 %v784, %v787
  %v789 = vmul.f32 %v785, %v787
  %v790 = vrot.slane %v779, 4
  %v791 = vadd.f32 %v779, %v790
  %v792 = vrot.slane %v791, 2
  %v793 = vadd.f32 %v791, %v792
  %v794 = vrot.slane %v793, 1
  %v795 = vadd.f32 %v793, %v794
  %v796 = vmul.f32 %v795, %v732
  %v797 = vsub.f32 %v779, %v796
  %v798 = vmul.f32 %v797, %v797
  %v799 = vrot.slane %v798, 4
  %v800 = vadd.f32 %v798, %v799
  %v801 = vrot.slane %v800, 2
  %v802 = vadd.f32 %v800, %v801
  %v803 = vrot.slane %v802, 1
  %v804 = vadd.f32 %v802, %v803
  %v805 = vmul.f32 %v804, %v742
  %v806 = vadd.f32 %v805, 1e-05
  %v807 = vrsqrt.pop %v806
  %v808 = vmul.f32 %v797, %v807
  %v809 = vmul.f32 %v808, %v770
  %811 = vset.pattern.permute.xlu0 1
  %812 = vperm.xlu0 %811, %v809
  %v813 = vpop.permute.xlu0 %812
  %v815 = vadd.f32 %v788, %v813
  %v816 = vadd.f32 %v789, %v813
  %818 = vset.pattern.permute.xlu0 0
  %819 = vperm.xlu0 %818, %v770
  %v820 = vpop.permute.xlu0 %819
  %v822 = vmul.f32 %v820, %v815
  %v823 = vmul.f32 %v820, %v816
  %824 = vset.pattern.permute.xlu0 2
  %825 = vperm.xlu0 %824, %v770
  %v826 = vpop.permute.xlu0 %825
  %v828 = vadd.f32 %v822, %v826
  %v829 = vadd.f32 %v823, %v826
  %v830 = vmax.f32 %v828, 0.0
  %v831 = vmax.f32 %v829, 0.0
  %832 = vst [vmem:[#allocation2 + $0x8] sm:$0xff] %v768
  %833 = vst [vmem:[#allocation2 + $0x10] sm:$0xff] %v769
  %834 = vst [vmem:[#allocation2 + $0x28] sm:$0xff] %v830
  %835 = vst [vmem:[#allocation2 + $0x30] sm:$0xff] %v831
  %v836 = vld [vmem:[#allocation2] sm:$0xff]
  %v837 = vld [vmem:[#allocation2 + $0x8] sm:$0xff]
  %v838 = vld [vmem:[#allocation2 + $0x10] sm:$0xff]
  %v839 = vmul.f32 %v836, %v61
  %v840 = vmul.f32 %v837, %v65
  %v841 = vmul.f32 %v838, %v63
  %845 = vrot.lane.b32.xlu0 %v839, 17
  %v846 = vpop.permute.xlu0 %845
  %847 = vrot.lane.b32.xlu0 %v840, 17
  %v848 = vpop.permute.xlu0 %847
  %849 = vrot.lane.b32.xlu0 %v841, 17
  %v850 = vpop.permute.xlu0 %849
  %v851 = vsel %vm81, %v846, %v848
  %v852 = vsel %vm81, %v848, %v850
  %855 = vst [vmem:[#allocation3] sm:$0xff] %v851
  %856 = vst [vmem:[#allocation3 + $0x8] sm:$0xff] %v852
  %v857 = vld [vmem:[#allocation2 + $0x20] sm:$0xff]
  %v858 = vld [vmem:[#allocation2 + $0x28] sm:$0xff]
  %v859 = vld [vmem:[#allocation2 + $0x30] sm:$0xff]
  %v860 = vmul.f32 %v857, %v61
  %v861 = vmul.f32 %v858, %v65
  %v862 = vmul.f32 %v859, %v63
  %866 = vrot.lane.b32.xlu0 %v860, 17
  %v867 = vpop.permute.xlu0 %866
  %868 = vrot.lane.b32.xlu0 %v861, 17
  %v869 = vpop.permute.xlu0 %868
  %870 = vrot.lane.b32.xlu0 %v862, 17
  %v871 = vpop.permute.xlu0 %870
  %v872 = vsel %vm81, %v867, %v869
  %v873 = vsel %vm81, %v869, %v871
  %876 = vst [vmem:[#allocation3 + $0x10] sm:$0xff] %v872
  %877 = vst [vmem:[#allocation3 + $0x18] sm:$0xff] %v873
  %v878 = vld [vmem:[#allocation2] sm:$0xff]
  %v879 = vld [vmem:[#allocation2 + $0x8] sm:$0xff]
  %v880 = vld [vmem:[#allocation2 + $0x10] sm:$0xff]
  %884 = vrot.lane.b32.xlu0 %v878, 16
  %v885 = vpop.permute.xlu0 %884
  %886 = vrot.lane.b32.xlu0 %v879, 16
  %v887 = vpop.permute.xlu0 %886
  %888 = vrot.lane.b32.xlu0 %v880, 16
  %v889 = vpop.permute.xlu0 %888
  %v890 = vsel %vm121, %v885, %v887
  %v891 = vsel %vm121, %v887, %v889
  %894 = vst [vmem:[#allocation3 + $0x20] sm:$0xff] %v890
  %895 = vst [vmem:[#allocation3 + $0x28] sm:$0xff] %v891
  %v896 = vld [vmem:[#allocation2 + $0x20] sm:$0xff]
  %v897 = vld [vmem:[#allocation2 + $0x28] sm:$0xff]
  %v898 = vld [vmem:[#allocation2 + $0x30] sm:$0xff]
  %902 = vrot.lane.b32.xlu0 %v896, 16
  %v903 = vpop.permute.xlu0 %902
  %904 = vrot.lane.b32.xlu0 %v897, 16
  %v905 = vpop.permute.xlu0 %904
  %906 = vrot.lane.b32.xlu0 %v898, 16
  %v907 = vpop.permute.xlu0 %906
  %v908 = vsel %vm121, %v903, %v905
  %v909 = vsel %vm121, %v905, %v907
  %912 = vst [vmem:[#allocation3 + $0x30] sm:$0xff] %v908
  %913 = vst [vmem:[#allocation3 + $0x38] sm:$0xff] %v909
  %v914 = vld [vmem:[#allocation2] sm:$0xff]
  %v915 = vld [vmem:[#allocation2 + $0x8] sm:$0xff]
  %v916 = vld [vmem:[#allocation2 + $0x10] sm:$0xff]
  %v917 = vmul.f32 %v914, %v160
  %v918 = vmul.f32 %v915, %v164
  %v919 = vmul.f32 %v916, %v162
  %923 = vrot.lane.b32.xlu0 %v917, 15
  %v924 = vpop.permute.xlu0 %923
  %925 = vrot.lane.b32.xlu0 %v918, 15
  %v926 = vpop.permute.xlu0 %925
  %927 = vrot.lane.b32.xlu0 %v919, 15
  %v928 = vpop.permute.xlu0 %927
  %v929 = vsel %vm180, %v924, %v926
  %v930 = vsel %vm180, %v926, %v928
  %933 = vst [vmem:[#allocation3 + $0x40] sm:$0xff] %v929
  %934 = vst [vmem:[#allocation3 + $0x48] sm:$0xff] %v930
  %v935 = vld [vmem:[#allocation2 + $0x20] sm:$0xff]
  %v936 = vld [vmem:[#allocation2 + $0x28] sm:$0xff]
  %v937 = vld [vmem:[#allocation2 + $0x30] sm:$0xff]
  %v938 = vmul.f32 %v935, %v160
  %v939 = vmul.f32 %v936, %v164
  %v940 = vmul.f32 %v937, %v162
  %944 = vrot.lane.b32.xlu0 %v938, 15
  %v945 = vpop.permute.xlu0 %944
  %946 = vrot.lane.b32.xlu0 %v939, 15
  %v947 = vpop.permute.xlu0 %946
  %948 = vrot.lane.b32.xlu0 %v940, 15
  %v949 = vpop.permute.xlu0 %948
  %v950 = vsel %vm180, %v945, %v947
  %v951 = vsel %vm180, %v947, %v949
  %954 = vst [vmem:[#allocation3 + $0x50] sm:$0xff] %v950
  %955 = vst [vmem:[#allocation3 + $0x58] sm:$0xff] %v951
  %v956 = vld [vmem:[#allocation2] sm:$0xff]
  %v957 = vld [vmem:[#allocation2 + $0x8] sm:$0xff]
  %v958 = vld [vmem:[#allocation2 + $0x10] sm:$0xff]
  %v959 = vmul.f32 %v956, %v222
  %v960 = vmul.f32 %v957, %v226
  %v961 = vmul.f32 %v958, %v224
  %965 = vrot.lane.b32.xlu0 %v959, 1
  %v966 = vpop.permute.xlu0 %965
  %967 = vrot.lane.b32.xlu0 %v960, 1
  %v968 = vpop.permute.xlu0 %967
  %969 = vrot.lane.b32.xlu0 %v961, 1
  %v970 = vpop.permute.xlu0 %969
  %v971 = vsel %vm242, %v966, %v968
  %v972 = vsel %vm242, %v968, %v970
  %975 = vst [vmem:[#allocation3 + $0x60] sm:$0xff] %v971
  %976 = vst [vmem:[#allocation3 + $0x68] sm:$0xff] %v972
  %v977 = vld [vmem:[#allocation2 + $0x20] sm:$0xff]
  %v978 = vld [vmem:[#allocation2 + $0x28] sm:$0xff]
  %v979 = vld [vmem:[#allocation2 + $0x30] sm:$0xff]
  %v980 = vmul.f32 %v977, %v222
  %v981 = vmul.f32 %v978, %v226
  %v982 = vmul.f32 %v979, %v224
  %986 = vrot.lane.b32.xlu0 %v980, 1
  %v987 = vpop.permute.xlu0 %986
  %988 = vrot.lane.b32.xlu0 %v981, 1
  %v989 = vpop.permute.xlu0 %988
  %990 = vrot.lane.b32.xlu0 %v982, 1
  %v991 = vpop.permute.xlu0 %990
  %v992 = vsel %vm242, %v987, %v989
  %v993 = vsel %vm242, %v989, %v991
  %996 = vst [vmem:[#allocation3 + $0x70] sm:$0xff] %v992
  %997 = vst [vmem:[#allocation3 + $0x78] sm:$0xff] %v993
  %v998 = vld [vmem:[#allocation2 + $0x8] sm:$0xff]
  %v999 = vld [vmem:[#allocation2 + $0x10] sm:$0xff]
  %1000 = vst [vmem:[#allocation3 + $0x80] sm:$0xff] %v998
  %1001 = vst [vmem:[#allocation3 + $0x88] sm:$0xff] %v999
  %v1002 = vld [vmem:[#allocation2 + $0x28] sm:$0xff]
  %v1003 = vld [vmem:[#allocation2 + $0x30] sm:$0xff]
  %1004 = vst [vmem:[#allocation3 + $0x90] sm:$0xff] %v1002
  %1005 = vst [vmem:[#allocation3 + $0x98] sm:$0xff] %v1003
  %v1006 = vld [vmem:[#allocation2 + $0x8] sm:$0xff]
  %v1007 = vld [vmem:[#allocation2 + $0x10] sm:$0xff]
  %v1008 = vld [vmem:[#allocation2 + $0x18] sm:$0xff]
  %v1009 = vmul.f32 %v1006, %v292
  %v1010 = vmul.f32 %v1007, %v295
  %v1011 = vmul.f32 %v1008, %v294
  %1015 = vrot.lane.b32.xlu0 %v1009, 127
  %v1016 = vpop.permute.xlu0 %1015
  %1017 = vrot.lane.b32.xlu0 %v1010, 127
  %v1018 = vpop.permute.xlu0 %1017
  %1019 = vrot.lane.b32.xlu0 %v1011, 127
  %v1020 = vpop.permute.xlu0 %1019
  %v1021 = vsel %vm225, %v1016, %v1018
  %v1022 = vsel %vm225, %v1018, %v1020
  %1025 = vst [vmem:[#allocation3 + $0xa0] sm:$0xff] %v1021
  %1026 = vst [vmem:[#allocation3 + $0xa8] sm:$0xff] %v1022
  %v1027 = vld [vmem:[#allocation2 + $0x28] sm:$0xff]
  %v1028 = vld [vmem:[#allocation2 + $0x30] sm:$0xff]
  %v1029 = vld [vmem:[#allocation2 + $0x38] sm:$0xff]
  %v1030 = vmul.f32 %v1027, %v292
  %v1031 = vmul.f32 %v1028, %v295
  %v1032 = vmul.f32 %v1029, %v294
  %1036 = vrot.lane.b32.xlu0 %v1030, 127
  %v1037 = vpop.permute.xlu0 %1036
  %1038 = vrot.lane.b32.xlu0 %v1031, 127
  %v1039 = vpop.permute.xlu0 %1038
  %1040 = vrot.lane.b32.xlu0 %v1032, 127
  %v1041 = vpop.permute.xlu0 %1040
  %v1042 = vsel %vm225, %v1037, %v1039
  %v1043 = vsel %vm225, %v1039, %v1041
  %1046 = vst [vmem:[#allocation3 + $0xb0] sm:$0xff] %v1042
  %1047 = vst [vmem:[#allocation3 + $0xb8] sm:$0xff] %v1043
  %v1048 = vld [vmem:[#allocation2 + $0x8] sm:$0xff]
  %v1049 = vld [vmem:[#allocation2 + $0x10] sm:$0xff]
  %v1050 = vld [vmem:[#allocation2 + $0x18] sm:$0xff]
  %v1051 = vmul.f32 %v1048, %v352
  %v1052 = vmul.f32 %v1049, %v355
  %v1053 = vmul.f32 %v1050, %v354
  %1057 = vrot.lane.b32.xlu0 %v1051, 113
  %v1058 = vpop.permute.xlu0 %1057
  %1059 = vrot.lane.b32.xlu0 %v1052, 113
  %v1060 = vpop.permute.xlu0 %1059
  %1061 = vrot.lane.b32.xlu0 %v1053, 113
  %v1062 = vpop.permute.xlu0 %1061
  %v1063 = vsel %vm163, %v1058, %v1060
  %v1064 = vsel %vm163, %v1060, %v1062
  %1067 = vst [vmem:[#allocation3 + $0xc0] sm:$0xff] %v1063
  %1068 = vst [vmem:[#allocation3 + $0xc8] sm:$0xff] %v1064
  %v1069 = vld [vmem:[#allocation2 + $0x28] sm:$0xff]
  %v1070 = vld [vmem:[#allocation2 + $0x30] sm:$0xff]
  %v1071 = vld [vmem:[#allocation2 + $0x38] sm:$0xff]
  %v1072 = vmul.f32 %v1069, %v352
  %v1073 = vmul.f32 %v1070, %v355
  %v1074 = vmul.f32 %v1071, %v354
  %1078 = vrot.lane.b32.xlu0 %v1072, 113
  %v1079 = vpop.permute.xlu0 %1078
  %1080 = vrot.lane.b32.xlu0 %v1073, 113
  %v1081 = vpop.permute.xlu0 %1080
  %1082 = vrot.lane.b32.xlu0 %v1074, 113
  %v1083 = vpop.permute.xlu0 %1082
  %v1084 = vsel %vm163, %v1079, %v1081
  %v1085 = vsel %vm163, %v1081, %v1083
  %1088 = vst [vmem:[#allocation3 + $0xd0] sm:$0xff] %v1084
  %1089 = vst [vmem:[#allocation3 + $0xd8] sm:$0xff] %v1085
  %v1090 = vld [vmem:[#allocation2 + $0x8] sm:$0xff]
  %v1091 = vld [vmem:[#allocation2 + $0x10] sm:$0xff]
  %v1092 = vld [vmem:[#allocation2 + $0x18] sm:$0xff]
  %1096 = vrot.lane.b32.xlu0 %v1090, 112
  %v1097 = vpop.permute.xlu0 %1096
  %1098 = vrot.lane.b32.xlu0 %v1091, 112
  %v1099 = vpop.permute.xlu0 %1098
  %1100 = vrot.lane.b32.xlu0 %v1092, 112
  %v1101 = vpop.permute.xlu0 %1100
  %v1102 = vsel %vm410, %v1097, %v1099
  %v1103 = vsel %vm410, %v1099, %v1101
  %1106 = vst [vmem:[#allocation3 + $0xe0] sm:$0xff] %v1102
  %1107 = vst [vmem:[#allocation3 + $0xe8] sm:$0xff] %v1103
  %v1108 = vld [vmem:[#allocation2 + $0x28] sm:$0xff]
  %v1109 = vld [vmem:[#allocation2 + $0x30] sm:$0xff]
  %v1110 = vld [vmem:[#allocation2 + $0x38] sm:$0xff]
  %1114 = vrot.lane.b32.xlu0 %v1108, 112
  %v1115 = vpop.permute.xlu0 %1114
  %1116 = vrot.lane.b32.xlu0 %v1109, 112
  %v1117 = vpop.permute.xlu0 %1116
  %1118 = vrot.lane.b32.xlu0 %v1110, 112
  %v1119 = vpop.permute.xlu0 %1118
  %v1120 = vsel %vm410, %v1115, %v1117
  %v1121 = vsel %vm410, %v1117, %v1119
  %1124 = vst [vmem:[#allocation3 + $0xf0] sm:$0xff] %v1120
  %1125 = vst [vmem:[#allocation3 + $0xf8] sm:$0xff] %v1121
  %v1126 = vld [vmem:[#allocation2 + $0x8] sm:$0xff]
  %v1127 = vld [vmem:[#allocation2 + $0x10] sm:$0xff]
  %v1128 = vld [vmem:[#allocation2 + $0x18] sm:$0xff]
  %v1129 = vmul.f32 %v1126, %v449
  %v1130 = vmul.f32 %v1127, %v452
  %v1131 = vmul.f32 %v1128, %v451
  %1135 = vrot.lane.b32.xlu0 %v1129, 111
  %v1136 = vpop.permute.xlu0 %1135
  %1137 = vrot.lane.b32.xlu0 %v1130, 111
  %v1138 = vpop.permute.xlu0 %1137
  %1139 = vrot.lane.b32.xlu0 %v1131, 111
  %v1140 = vpop.permute.xlu0 %1139
  %v1141 = vsel %vm64, %v1136, %v1138
  %v1142 = vsel %vm64, %v1138, %v1140
  %1145 = vst [vmem:[#allocation3 + $0x100] sm:$0xff] %v1141
  %1146 = vst [vmem:[#allocation3 + $0x108] sm:$0xff] %v1142
  %v1147 = vld [vmem:[#allocation2 + $0x28] sm:$0xff]
  %v1148 = vld [vmem:[#allocation2 + $0x30] sm:$0xff]
  %v1149 = vld [vmem:[#allocation2 + $0x38] sm:$0xff]
  %v1150 = vmul.f32 %v1147, %v449
  %v1151 = vmul.f32 %v1148, %v452
  %v1152 = vmul.f32 %v1149, %v451
  %1156 = vrot.lane.b32.xlu0 %v1150, 111
  %v1157 = vpop.permute.xlu0 %1156
  %1158 = vrot.lane.b32.xlu0 %v1151, 111
  %v1159 = vpop.permute.xlu0 %1158
  %1160 = vrot.lane.b32.xlu0 %v1152, 111
  %v1161 = vpop.permute.xlu0 %1160
  %v1162 = vsel %vm64, %v1157, %v1159
  %v1163 = vsel %vm64, %v1159, %v1161
  %1166 = vst [vmem:[#allocation3 + $0x110] sm:$0xff] %v1162
  %1167 = vst [vmem:[#allocation3 + $0x118] sm:$0xff] %v1163
  %v1168 = vld [vmem:[%s5] sm:$0xff]
  %v1169 = vld [vmem:[#allocation3] sm:$0xff]
  %v1170 = vld [vmem:[#allocation3 + $0x8] sm:$0xff]
  %v1171 = vld [vmem:[#allocation3 + $0x10] sm:$0xff]
  %v1172 = vld [vmem:[#allocation3 + $0x18] sm:$0xff]
  %v1173 = vld [vmem:[#allocation3 + $0x20] sm:$0xff]
  %v1174 = vld [vmem:[#allocation3 + $0x28] sm:$0xff]
  %v1175 = vld [vmem:[#allocation3 + $0x30] sm:$0xff]
  %v1176 = vld [vmem:[#allocation3 + $0x38] sm:$0xff]
  %v1177 = vld [vmem:[#allocation3 + $0x40] sm:$0xff]
  %v1178 = vld [vmem:[#allocation3 + $0x48] sm:$0xff]
  %v1179 = vld [vmem:[#allocation3 + $0x50] sm:$0xff]
  %v1180 = vld [vmem:[#allocation3 + $0x58] sm:$0xff]
  %v1181 = vld [vmem:[#allocation3 + $0x60] sm:$0xff]
  %v1182 = vld [vmem:[#allocation3 + $0x68] sm:$0xff]
  %v1183 = vld [vmem:[#allocation3 + $0x70] sm:$0xff]
  %v1184 = vld [vmem:[#allocation3 + $0x78] sm:$0xff]
  %v1185 = vld [vmem:[#allocation3 + $0x80] sm:$0xff]
  %v1186 = vld [vmem:[#allocation3 + $0x88] sm:$0xff]
  %v1187 = vld [vmem:[#allocation3 + $0x90] sm:$0xff]
  %v1188 = vld [vmem:[#allocation3 + $0x98] sm:$0xff]
  %v1189 = vld [vmem:[#allocation3 + $0xa0] sm:$0xff]
  %v1190 = vld [vmem:[#allocation3 + $0xa8] sm:$0xff]
  %v1191 = vld [vmem:[#allocation3 + $0xb0] sm:$0xff]
  %v1192 = vld [vmem:[#allocation3 + $0xb8] sm:$0xff]
  %v1193 = vld [vmem:[#allocation3 + $0xc0] sm:$0xff]
  %v1194 = vld [vmem:[#allocation3 + $0xc8] sm:$0xff]
  %v1195 = vld [vmem:[#allocation3 + $0xd0] sm:$0xff]
  %v1196 = vld [vmem:[#allocation3 + $0xd8] sm:$0xff]
  %v1197 = vld [vmem:[#allocation3 + $0xe0] sm:$0xff]
  %v1198 = vld [vmem:[#allocation3 + $0xe8] sm:$0xff]
  %v1199 = vld [vmem:[#allocation3 + $0xf0] sm:$0xff]
  %v1200 = vld [vmem:[#allocation3 + $0xf8] sm:$0xff]
  %v1201 = vld [vmem:[#allocation3 + $0x100] sm:$0xff]
  %v1202 = vld [vmem:[#allocation3 + $0x108] sm:$0xff]
  %v1203 = vld [vmem:[#allocation3 + $0x110] sm:$0xff]
  %v1204 = vld [vmem:[#allocation3 + $0x118] sm:$0xff]
  %v1205 = vld [vmem:[%s6] sm:$0xff]
  %1207 = vset.pattern.permute.xlu0 0
  %1208 = vperm.xlu0 %1207, %v1205
  %v1209 = vpop.permute.xlu0 %1208
  %v1212 = vsel %vm545, %v1168, 0
  %1214 = vmatprep.subr.mxu0 %v1170
  %1215 = vmatpush1.msra.mxu0 %v1169
  %1216 = vmatprep.subr.mxu0 %v1174
  %1217 = vmatpush1.msra.mxu0 %v1173
  %1218 = vmatprep.subr.mxu0 %v1178
  %1219 = vmatpush1.msra.mxu0 %v1177
  %1220 = vmatprep.subr.mxu0 %v1182
  %1221 = vmatpush1.msra.mxu0 %v1181
  %1222 = vmatprep.subr.mxu0 %v1186
  %1223 = vmatpush1.msra.mxu0 %v1185
  %1224 = vmatprep.subr.mxu0 %v1190
  %1225 = vmatpush1.msra.mxu0 %v1189
  %1226 = vmatprep.subr.mxu0 %v1194
  %1227 = vmatpush1.msra.mxu0 %v1193
  %1228 = vmatprep.subr.mxu0 %v1198
  %1229 = vmatpush1.msra.mxu0 %v1197
  %1230 = vmatprep.subr.mxu0 %v1202
  %1231 = vmatpush1.msra.mxu0 %v1201
  %1232 = vmatprep.subr.mxu0 0.0
  %1233 = vmatpush1.msra.mxu0 0.0
  %1234 = vmatprep.subr.mxu0 0.0
  %1235 = vmatpush1.msra.mxu0 0.0
  %1236 = vmatprep.subr.mxu0 0.0
  %1237 = vmatpush1.msra.mxu0 0.0
  %1238 = vmatprep.subr.mxu0 0.0
  %1239 = vmatpush1.msra.mxu0 0.0
  %1240 = vmatprep.subr.mxu0 0.0
  %1241 = vmatpush1.msra.mxu0 0.0
  %1242 = vmatprep.subr.mxu0 0.0
  %1243 = vmatpush1.msra.mxu0 0.0
  %1244 = vmatprep.subr.mxu0 0.0
  %1245 = vmatpush1.msra.mxu0 0.0
  %1246 = vmatprep.subr.mxu0 0.0
  %1247 = vmatpush1.msra.mxu0 0.0
  %1248 = vmatprep.subr.mxu0 0.0
  %1249 = vmatpush1.msra.mxu0 0.0
  %1250 = vmatprep.subr.mxu0 0.0
  %1251 = vmatpush1.msra.mxu0 0.0
  %1252 = vmatprep.subr.mxu0 0.0
  %1253 = vmatpush1.msra.mxu0 0.0
  %1254 = vmatprep.subr.mxu0 0.0
  %1255 = vmatpush1.msra.mxu0 0.0
  %1256 = vmatprep.subr.mxu0 0.0
  %1257 = vmatpush1.msra.mxu0 0.0
  %1258 = vmatprep.subr.mxu0 0.0
  %1259 = vmatpush1.msra.mxu0 0.0
  %1260 = vmatprep.subr.mxu0 0.0
  %1261 = vmatpush1.msra.mxu0 0.0
  %1262 = vmatprep.subr.mxu0 0.0
  %1263 = vmatpush1.msra.mxu0 0.0
  %1264 = vmatprep.subr.mxu0 0.0
  %1265 = vmatpush1.msra.mxu0 0.0
  %1266 = vmatprep.subr.mxu0 0.0
  %1267 = vmatpush1.msra.mxu0 0.0
  %1268 = vmatprep.subr.mxu0 0.0
  %1269 = vmatpush1.msra.mxu0 0.0
  %1270 = vmatprep.subr.mxu0 0.0
  %1271 = vmatpush1.msra.mxu0 0.0
  %1272 = vmatprep.subr.mxu0 0.0
  %1273 = vmatpush1.msra.mxu0 0.0
  %1274 = vmatprep.subr.mxu0 0.0
  %1275 = vmatpush1.msra.mxu0 0.0
  %1276 = vmatprep.subr.mxu0 0.0
  %1277 = vmatpush1.msra.mxu0 0.0
  %1278 = vmatprep.mubr.f32.mxu0 0.0
  %1279 = vmatmul.mubr.f32.gmra.mrb[0].mxu0 %v1212
  %v1280 = vpop.f32.mrb[0].mxu0
  %v1281 = vadd.f32 %v1209, %v1280
  %v1282 = vpop.f32.mrb[0].mxu0
  %v1283 = vadd.f32 %v1209, %v1282
  %1284 = vdwg.mxu0
  %1285 = vmatprep.subr.mxu0 %v1172
  %1286 = vmatpush1.msra.mxu0 %v1171
  %1287 = vmatprep.subr.mxu0 %v1176
  %1288 = vmatpush1.msra.mxu0 %v1175
  %1289 = vmatprep.subr.mxu0 %v1180
  %1290 = vmatpush1.msra.mxu0 %v1179
  %1291 = vmatprep.subr.mxu0 %v1184
  %1292 = vmatpush1.msra.mxu0 %v1183
  %1293 = vmatprep.subr.mxu0 %v1188
  %1294 = vmatpush1.msra.mxu0 %v1187
  %1295 = vmatprep.subr.mxu0 %v1192
  %1296 = vmatpush1.msra.mxu0 %v1191
  %1297 = vmatprep.subr.mxu0 %v1196
  %1298 = vmatpush1.msra.mxu0 %v1195
  %1299 = vmatprep.subr.mxu0 %v1200
  %1300 = vmatpush1.msra.mxu0 %v1199
  %1301 = vmatprep.subr.mxu0 %v1204
  %1302 = vmatpush1.msra.mxu0 %v1203
  %1303 = vmatprep.subr.mxu0 0.0
  %1304 = vmatpush1.msra.mxu0 0.0
  %1305 = vmatprep.subr.mxu0 0.0
  %1306 = vmatpush1.msra.mxu0 0.0
  %1307 = vmatprep.subr.mxu0 0.0
  %1308 = vmatpush1.msra.mxu0 0.0
  %1309 = vmatprep.subr.mxu0 0.0
  %1310 = vmatpush1.msra.mxu0 0.0
  %1311 = vmatprep.subr.mxu0 0.0
  %1312 = vmatpush1.msra.mxu0 0.0
  %1313 = vmatprep.subr.mxu0 0.0
  %1314 = vmatpush1.msra.mxu0 0.0
  %1315 = vmatprep.subr.mxu0 0.0
  %1316 = vmatpush1.msra.mxu0 0.0
  %1317 = vmatprep.subr.mxu0 0.0
  %1318 = vmatpush1.msra.mxu0 0.0
  %1319 = vmatprep.subr.mxu0 0.0
  %1320 = vmatpush1.msra.mxu0 0.0
  %1321 = vmatprep.subr.mxu0 0.0
  %1322 = vmatpush1.msra.mxu0 0.0
  %1323 = vmatprep.subr.mxu0 0.0
  %1324 = vmatpush1.msra.mxu0 0.0
  %1325 = vmatprep.subr.mxu0 0.0
  %1326 = vmatpush1.msra.mxu0 0.0
  %1327 = vmatprep.subr.mxu0 0.0
  %1328 = vmatpush1.msra.mxu0 0.0
  %1329 = vmatprep.subr.mxu0 0.0
  %1330 = vmatpush1.msra.mxu0 0.0
  %1331 = vmatprep.subr.mxu0 0.0
  %1332 = vmatpush1.msra.mxu0 0.0
  %1333 = vmatprep.subr.mxu0 0.0
  %1334 = vmatpush1.msra.mxu0 0.0
  %1335 = vmatprep.subr.mxu0 0.0
  %1336 = vmatpush1.msra.mxu0 0.0
  %1337 = vmatprep.subr.mxu0 0.0
  %1338 = vmatpush1.msra.mxu0 0.0
  %1339 = vmatprep.subr.mxu0 0.0
  %1340 = vmatpush1.msra.mxu0 0.0
  %1341 = vmatprep.subr.mxu0 0.0
  %1342 = vmatpush1.msra.mxu0 0.0
  %1343 = vmatprep.subr.mxu0 0.0
  %1344 = vmatpush1.msra.mxu0 0.0
  %1345 = vmatprep.subr.mxu0 0.0
  %1346 = vmatpush1.msra.mxu0 0.0
  %1347 = vmatprep.subr.mxu0 0.0
  %1348 = vmatpush1.msra.mxu0 0.0
  %1349 = vmatprep.mubr.f32.mxu0 0.0
  %1350 = vmatmul.mubr.f32.gmra.mrb[0].mxu0 %v1212
  %v1351 = vpop.f32.mrb[0].mxu0
  %v1352 = vadd.f32 %v1209, %v1351
  %v1353 = vpop.f32.mrb[0].mxu0
  %v1354 = vadd.f32 %v1209, %v1353
  %1355 = vdwg.mxu0
  %v1356 = vld [vmem:[%s7] sm:$0xff]
  %v1357 = vadd.f32 %v1281, %v1283
  %1358 = vadd.xlane.f32.xlu0 %v1357
  %v1359 = vpop.xlane.xlu0 %1358
  %v1360 = vmul.f32 %v1281, %v1281
  %v1361 = vmul.f32 %v1283, %v1283
  %v1362 = vadd.f32 %v1360, %v1361
  %1363 = vadd.xlane.f32.xlu0 %v1362
  %v1364 = vpop.xlane.xlu0 %1363
  %v1365 = vmul.f32 %v1359, 0.00390625
  %v1366 = vmul.f32 %v1364, 0.00390625
  %v1367 = vmul.f32 %v1365, %v1365
  %v1368 = vsub.f32 %v1366, %v1367
  %v1369 = vmax.f32 %v1368, 0.0
  %v1370 = vsub.f32 %v1281, %v1365
  %v1371 = vsub.f32 %v1283, %v1365
  %v1372 = vadd.f32 %v1369, 1e-05
  %v1373 = vrsqrt.pop %v1372
  %v1374 = vmul.f32 %v1370, %v1373
  %v1375 = vmul.f32 %v1371, %v1373
  %v1376 = vrot.slane %v1365, 4
  %v1377 = vadd.f32 %v1365, %v1376
  %v1378 = vrot.slane %v1377, 2
  %v1379 = vadd.f32 %v1377, %v1378
  %v1380 = vrot.slane %v1379, 1
  %v1381 = vadd.f32 %v1379, %v1380
  %v1382 = vmul.f32 %v1381, %v732
  %v1383 = vsub.f32 %v1365, %v1382
  %v1384 = vmul.f32 %v1383, %v1383
  %v1385 = vrot.slane %v1384, 4
  %v1386 = vadd.f32 %v1384, %v1385
  %v1387 = vrot.slane %v1386, 2
  %v1388 = vadd.f32 %v1386, %v1387
  %v1389 = vrot.slane %v1388, 1
  %v1390 = vadd.f32 %v1388, %v1389
  %v1391 = vmul.f32 %v1390, %v742
  %v1392 = vadd.f32 %v1391, 1e-05
  %v1393 = vrsqrt.pop %v1392
  %v1394 = vmul.f32 %v1383, %v1393
  %v1395 = vmul.f32 %v1394, %v1356
  %1397 = vset.pattern.permute.xlu0 1
  %1398 = vperm.xlu0 %1397, %v1395
  %v1399 = vpop.permute.xlu0 %1398
  %v1401 = vadd.f32 %v1374, %v1399
  %v1402 = vadd.f32 %v1375, %v1399
  %1404 = vset.pattern.permute.xlu0 0
  %1405 = vperm.xlu0 %1404, %v1356
  %v1406 = vpop.permute.xlu0 %1405
  %v1408 = vmul.f32 %v1406, %v1401
  %v1409 = vmul.f32 %v1406, %v1402
  %1410 = vset.pattern.permute.xlu0 2
  %1411 = vperm.xlu0 %1410, %v1356
  %v1412 = vpop.permute.xlu0 %1411
  %v1414 = vadd.f32 %v1408, %v1412
  %v1415 = vadd.f32 %v1409, %v1412
  %v1416 = vmax.f32 %v1414, 0.0
  %v1417 = vmax.f32 %v1415, 0.0
  %v1418 = vld [vmem:[%s7 + $0x8] sm:$0xff]
  %v1419 = vadd.f32 %v1352, %v1354
  %1420 = vadd.xlane.f32.xlu0 %v1419
  %v1421 = vpop.xlane.xlu0 %1420
  %v1422 = vmul.f32 %v1352, %v1352
  %v1423 = vmul.f32 %v1354, %v1354
  %v1424 = vadd.f32 %v1422, %v1423
  %1425 = vadd.xlane.f32.xlu0 %v1424
  %v1426 = vpop.xlane.xlu0 %1425
  %v1427 = vmul.f32 %v1421, 0.00390625
  %v1428 = vmul.f32 %v1426, 0.00390625
  %v1429 = vmul.f32 %v1427, %v1427
  %v1430 = vsub.f32 %v1428, %v1429
  %v1431 = vmax.f32 %v1430, 0.0
  %v1432 = vsub.f32 %v1352, %v1427
  %v1433 = vsub.f32 %v1354, %v1427
  %v1434 = vadd.f32 %v1431, 1e-05
  %v1435 = vrsqrt.pop %v1434
  %v1436 = vmul.f32 %v1432, %v1435
  %v1437 = vmul.f32 %v1433, %v1435
  %v1438 = vrot.slane %v1427, 4
  %v1439 = vadd.f32 %v1427, %v1438
  %v1440 = vrot.slane %v1439, 2
  %v1441 = vadd.f32 %v1439, %v1440
  %v1442 = vrot.slane %v1441, 1
  %v1443 = vadd.f32 %v1441, %v1442
  %v1444 = vmul.f32 %v1443, %v732
  %v1445 = vsub.f32 %v1427, %v1444
  %v1446 = vmul.f32 %v1445, %v1445
  %v1447 = vrot.slane %v1446, 4
  %v1448 = vadd.f32 %v1446, %v1447
  %v1449 = vrot.slane %v1448, 2
  %v1450 = vadd.f32 %v1448, %v1449
  %v1451 = vrot.slane %v1450, 1
  %v1452 = vadd.f32 %v1450, %v1451
  %v1453 = vmul.f32 %v1452, %v742
  %v1454 = vadd.f32 %v1453, 1e-05
  %v1455 = vrsqrt.pop %v1454
  %v1456 = vmul.f32 %v1445, %v1455
  %v1457 = vmul.f32 %v1456, %v1418
  %1459 = vset.pattern.permute.xlu0 1
  %1460 = vperm.xlu0 %1459, %v1457
  %v1461 = vpop.permute.xlu0 %1460
  %v1463 = vadd.f32 %v1436, %v1461
  %v1464 = vadd.f32 %v1437, %v1461
  %1466 = vset.pattern.permute.xlu0 0
  %1467 = vperm.xlu0 %1466, %v1418
  %v1468 = vpop.permute.xlu0 %1467
  %v1470 = vmul.f32 %v1468, %v1463
  %v1471 = vmul.f32 %v1468, %v1464
  %1472 = vset.pattern.permute.xlu0 2
  %1473 = vperm.xlu0 %1472, %v1418
  %v1474 = vpop.permute.xlu0 %1473
  %v1476 = vadd.f32 %v1470, %v1474
  %v1477 = vadd.f32 %v1471, %v1474
  %v1478 = vmax.f32 %v1476, 0.0
  %v1479 = vmax.f32 %v1477, 0.0
  %v1480 = vadd.f32 %v1416, %v625
  %v1481 = vadd.f32 %v1417, %v627
  %1482 = vst [vmem:[%s8] sm:$0xff] %v1480
  %1483 = vst [vmem:[%s8 + $0x8] sm:$0xff] %v1481
  %v1484 = vadd.f32 %v1478, %v702
  %v1485 = vadd.f32 %v1479, %v704
  %1486 = vst [vmem:[%s8 + $0x10] sm:$0xff] %v1484
  %1487 = vst [vmem:[%s8 + $0x18] sm:$0xff] %v1485
  // Predicated region
  $region34: #{conv_block_forward.1} parent=0 // pred_check
    _
  $region35: #{conv_block_forward.1} parent=0 // pred_check_branch
    %1489 = sbr.rel (0) target = $region37
  $region36: #{conv_block_forward.1} parent=0 // pred_region
    _
  $region37: #{conv_block_forward.1} parent=0 // pred_fallthru
    _
  // Predicated region
  $region38: #{conv_block_forward.1} parent=0 // pred_check
    _
  $region39: #{conv_block_forward.1} parent=0 // pred_check_branch
    %1491 = sbr.rel (0) target = $region41
  $region40: #{conv_block_forward.1} parent=0 // pred_region
    _
  $region41: #{conv_block_forward.1} parent=0 // pred_fallthru
    _

</llo_original>
